<compile_context>
chip_gen: v7x
topology: tpu7x:2x2x1
jax: 0.10.0
libtpu: 0.0.40
codegen_flags: <defaults>
</compile_context>

<pallas_src>
import functools

import jax
import jax.numpy as jnp
import numpy as np
from jax import lax
from jax.experimental import pallas as pl
from jax.experimental.pallas import tpu as pltpu


def _mha_kernel(q_ref, k_ref, v_ref,
                wq_ref, bq_ref, wk_ref, bk_ref, wv_ref, bv_ref,
                wo_ref, bo_ref,
                out_ref, *rest,
                heads_per_group: int, head_dim: int, num_groups: int,
                need_weights: bool):
    # rest = ([attn_ref], kc_ref, vc_ref, ctx_ref)
    if need_weights:
        attn_ref, kc_ref, vc_ref, ctx_ref = rest
    else:
        attn_ref = None
        kc_ref, vc_ref, ctx_ref = rest

    t_idx = pl.program_id(1)        # query-tile index   (arbitrary axis)
    hg = pl.program_id(2)           # head-group index   (innermost, arbitrary)
    G, D = heads_per_group, head_dim

    # ---- K/V projection for this head group: once per batch element --------
    # Computed at the first query tile and cached (bf16) in VMEM scratch; all
    # later query tiles of the same batch element reuse it.
    @pl.when(t_idx == 0)
    def _():
        k_in = k_ref[0]                                                # (S, E) bf16
        v_in = v_ref[0]
        kp = jnp.dot(k_in, wk_ref[hg],
                     preferred_element_type=jnp.float32) + bk_ref[hg]  # (S, G*D) f32
        vp = jnp.dot(v_in, wv_ref[hg],
                     preferred_element_type=jnp.float32) + bv_ref[hg]
        kc_ref[hg] = kp.astype(kc_ref.dtype)
        vc_ref[hg] = vp.astype(vc_ref.dtype)

    # ---- Q projection for this tile / head group ---------------------------
    # Softmax scale is already folded into wq/bq in the wrapper.
    qg = jnp.dot(q_ref[0], wq_ref[hg],
                 preferred_element_type=jnp.float32) + bq_ref[hg]      # (TQ, G*D) f32
    qg = qg.astype(jnp.bfloat16)

    kg = kc_ref[hg]                                                    # (S, G*D) bf16
    vg = vc_ref[hg]

    # ---- attention per head inside the group (G is 1 or 2 for real D) ------
    ctx_parts = []
    for g in range(G):                       # tiny static loop, bounded vregs
        sl = slice(g * D, (g + 1) * D)
        qh, kh, vh = qg[:, sl], kg[:, sl], vg[:, sl]
        # scores = qh @ kh^T; transpose folded into the contraction dims.
        s = lax.dot_general(qh, kh, (((1,), (1,)), ((), ())),
                            preferred_element_type=jnp.float32)        # (TQ, S) f32
        m = jnp.max(s, axis=-1, keepdims=True)
        e = jnp.exp(s - m)
        p = e / jnp.sum(e, axis=-1, keepdims=True)   # exact f32 softmax (parity
        if need_weights:                             # of exported attn weights)
            attn_ref[0, g] = p
        ctx_parts.append(jnp.dot(p.astype(jnp.bfloat16), vh,
                                 preferred_element_type=jnp.float32))  # (TQ, D) f32

    ctx_group = ctx_parts[0] if G == 1 else jnp.concatenate(ctx_parts, axis=-1)
    ctx_ref[hg] = ctx_group                                            # stage for out-proj

    # ---- fused output projection at the last head group --------------------
    # One full-E-deep (TQ,E)@(E,E) matmul instead of H depth-D matmuls, and a
    # single store into the output block.
    @pl.when(hg == num_groups - 1)
    def _():
        if num_groups == 1:
            ctx_flat = ctx_ref[0]                                      # (TQ, E) f32
        else:
            ctx_flat = jnp.concatenate(
                [ctx_ref[i] for i in range(num_groups)], axis=-1)      # head-major (TQ, E)
        out_ref[0] = (jnp.dot(ctx_flat.astype(jnp.bfloat16), wo_ref[...],
                              preferred_element_type=jnp.float32)
                      + bo_ref[...])


def _pinned_spec(shape, index_map):
    """BlockSpec for operands whose block index is constant over the inner grid
    axes: single-buffer them (double buffering would only waste VMEM)."""
    try:
        return pl.BlockSpec(shape, index_map, pipeline_mode=pl.Buffered(1))
    except Exception:  # pragma: no cover - jax without pipeline_mode support
        return pl.BlockSpec(shape, index_map)


def multi_head_attention(query, key, value, params, *, num_heads: int,
                         need_weights: bool = True):
    """query: (B, T, E); key/value: (B, S, E).

    Returns (output (B,T,E) f32, attn (B,H,T,S) f32) when need_weights=True
    (module semantics), or just the output when need_weights=False.
    """
    B, T, E = query.shape
    S = key.shape[1]
    H = num_heads
    D = E // H
    assert D * H == E, "embed_dim must be divisible by num_heads"

    if B == 0:  # mirror the module's empty-batch early return
        out = jnp.zeros((0, T, E), jnp.float32)
        if need_weights:
            return out, jnp.zeros((0, H, T, S), jnp.float32)
        return out

    wq, bq, wk, bk, wv, bv, wo, bo = params
    scale = D ** (-0.5)

    # Group heads so that the projection matmul output width (G*D) is >= 128
    # lanes where the head count allows it (MXU column utilization).
    G = 1
    while G < H and G * D < 128 and H % (2 * G) == 0:
        G *= 2
    GD = G * D
    HG = H // G

    # Fold the softmax scale into the q projection (free, one-time).
    wq_s, bq_s = wq * scale, bq * scale

    # Head-group-major weight layouts, bf16 for the MXU.
    # PyTorch Linear weight is (out, in): w3[hg, e_in, g*D+d] = W[(hg*G+g)*D+d, e_in]
    def head_w(w):
        return jnp.transpose(w.reshape(HG, GD, E), (0, 2, 1)).astype(jnp.bfloat16)

    def head_b(b):                       # biases stay f32 (added post-accumulation)
        return b.reshape(HG, 1, GD).astype(jnp.float32)

    wq3, wk3, wv3 = head_w(wq_s), head_w(wk), head_w(wv)
    bq3, bk3, bv3 = head_b(bq_s), head_b(bk), head_b(bv)
    wo2 = wo.T.astype(jnp.bfloat16)      # (E_in head-major, E_out)
    bo2 = bo.reshape(1, E).astype(jnp.float32)

    # Query tiling: pad T up to a multiple of the tile so the VMEM bound holds
    # for any T.  128 is v7x-safe; 256 is also fine on v5e/v6e's 128 MiB VMEM.
    if T <= 256:
        TQ = T
    else:
        TQ = 128
    T_pad = -(-T // TQ) * TQ
    n_t = T_pad // TQ

    q_in = query.astype(jnp.bfloat16)
    if T_pad != T:
        q_in = jnp.pad(q_in, ((0, 0), (0, T_pad - T), (0, 0)))
    k_in = key.astype(jnp.bfloat16)
    v_in = value.astype(jnp.bfloat16)

    # Explicit scoped-VMEM budget from the actual block footprint (review: the
    # default 16/32 MiB scoped limit is too small at realistic E/S).
    F32, BF16 = 4, 2
    vmem_est = (
        2 * TQ * E * BF16                       # q tile (double buffered)
        + 2 * S * E * BF16                      # raw K + V (single buffered)
        + 3 * HG * E * GD * BF16                # q/k/v projection weights
        + E * E * BF16                          # out-proj weight
        + 3 * HG * GD * F32 + E * F32           # biases
        + 2 * HG * S * GD * BF16                # K/V projection caches (scratch)
        + HG * TQ * GD * F32                    # ctx scratch
        + 2 * TQ * E * F32                      # out block (double buffered)
        + (2 * G * TQ * S * F32 if need_weights else 0)  # attn block
        + 4 * TQ * S * F32                      # scores / softmax temporaries
    )
    vmem_limit = int(min(max(2 * vmem_est, 32 * 2**20), 128 * 2**20))

    kernel = functools.partial(_mha_kernel, heads_per_group=G, head_dim=D,
                               num_groups=HG, need_weights=need_weights)

    in_specs = [
        pl.BlockSpec((1, TQ, E), lambda b, t, hg: (b, t, 0)),      # query tile
        _pinned_spec((1, S, E), lambda b, t, hg: (b, 0, 0)),       # key   (read at t==0 only)
        _pinned_spec((1, S, E), lambda b, t, hg: (b, 0, 0)),       # value (read at t==0 only)
        _pinned_spec((HG, E, GD), lambda b, t, hg: (0, 0, 0)),     # wq (scale folded)
        _pinned_spec((HG, 1, GD), lambda b, t, hg: (0, 0, 0)),     # bq
        _pinned_spec((HG, E, GD), lambda b, t, hg: (0, 0, 0)),     # wk
        _pinned_spec((HG, 1, GD), lambda b, t, hg: (0, 0, 0)),     # bk
        _pinned_spec((HG, E, GD), lambda b, t, hg: (0, 0, 0)),     # wv
        _pinned_spec((HG, 1, GD), lambda b, t, hg: (0, 0, 0)),     # bv
        _pinned_spec((E, E), lambda b, t, hg: (0, 0)),             # wo (head-major in)
        _pinned_spec((1, E), lambda b, t, hg: (0, 0)),             # bo
    ]

    out_shapes = [jax.ShapeDtypeStruct((B, T_pad, E), jnp.float32)]
    out_specs = [pl.BlockSpec((1, TQ, E), lambda b, t, hg: (b, t, 0))]
    if need_weights:
        out_shapes.append(jax.ShapeDtypeStruct((B, H, T_pad, S), jnp.float32))
        out_specs.append(pl.BlockSpec((1, G, TQ, S), lambda b, t, hg: (b, hg, t, 0)))

    grid_spec = pltpu.PrefetchScalarGridSpec(
        num_scalar_prefetch=0,
        grid=(B, n_t, HG),
        in_specs=in_specs,
        out_specs=out_specs,
        scratch_shapes=[
            pltpu.VMEM((HG, S, GD), jnp.bfloat16),   # cached K projection
            pltpu.VMEM((HG, S, GD), jnp.bfloat16),   # cached V projection
            pltpu.VMEM((HG, TQ, GD), jnp.float32),   # staged per-group context
        ],
    )

    results = pl.pallas_call(
        kernel,
        out_shape=tuple(out_shapes),
        grid_spec=grid_spec,
        compiler_params=pltpu.CompilerParams(
            # Batch axis sharded across cores (v7x megacore); query-tile and
            # head-group axes are sequential so the K/V cache written at t==0
            # and the per-tile ctx accumulation stay valid.
            # TODO(synk): for B==1 serving on v7x, a head-parallel grid variant
            # would use the second TensorCore.
            dimension_semantics=("parallel", "arbitrary", "arbitrary"),
            vmem_limit_bytes=vmem_limit),
    )(q_in, k_in, v_in, wq3, bq3, wk3, bk3, wv3, bv3, wo2, bo2)

    out = results[0]
    if T_pad != T:
        out = out[:, :T, :]
    if need_weights:
        attn = results[1]
        if T_pad != T:
            attn = attn[:, :, :T, :]
        return out, attn
    return out


def _reference(query, key, value, params, *, num_heads: int):
    """Pure-JAX f32 reference mirroring the PyTorch forward."""
    wq, bq, wk, bk, wv, bv, wo, bo = params
    B, T, E = query.shape
    S = key.shape[1]
    H = num_heads
    D = E // H
    scale = D ** (-0.5)

    q = (query @ wq.T + bq).reshape(B, T, H, D).transpose(0, 2, 1, 3)
    k = (key @ wk.T + bk).reshape(B, S, H, D).transpose(0, 2, 1, 3)
    v = (value @ wv.T + bv).reshape(B, S, H, D).transpose(0, 2, 1, 3)
    scores = jnp.einsum("bhtd,bhsd->bhts", q, k) * scale
    attn = jax.nn.softmax(scores, axis=-1)
    ctx = jnp.einsum("bhts,bhsd->bhtd", attn, v)
    ctx = ctx.transpose(0, 2, 1, 3).reshape(B, T, E)
    out = ctx @ wo.T + bo
    return out, attn


if __name__ == "__main__":
    def run_case(B, T, S, E, H, seed, check_no_weights=False):
        keys = jax.random.split(jax.random.PRNGKey(seed), 11)
        query = jax.random.normal(keys[0], (B, T, E), dtype=jnp.float32)
        key_t = jax.random.normal(keys[1], (B, S, E), dtype=jnp.float32)
        value = jax.random.normal(keys[2], (B, S, E), dtype=jnp.float32)

        def init_linear(kw, kb):  # nn.Linear shapes: W (out,in), b (out,)
            w = 0.05 * jax.random.normal(kw, (E, E), dtype=jnp.float32)
            b = 0.01 * jax.random.normal(kb, (E,), dtype=jnp.float32)
            return w, b

        wq, bq = init_linear(keys[3], keys[4])
        wk, bk = init_linear(keys[5], keys[6])
        wv, bv = init_linear(keys[7], keys[8])
        wo, bo = init_linear(keys[9], keys[10])
        params = (wq, bq, wk, bk, wv, bv, wo, bo)

        out, attn = multi_head_attention(query, key_t, value, params, num_heads=H)
        jax.block_until_ready((out, attn))
        ref_out, ref_attn = _reference(query, key_t, value, params, num_heads=H)
        # Tolerance sized for bf16 MXU operands (f32 accumulation / f32 softmax).
        np.testing.assert_allclose(np.asarray(out), np.asarray(ref_out),
                                   rtol=2e-2, atol=2e-2)
        np.testing.assert_allclose(np.asarray(attn), np.asarray(ref_attn),
                                   rtol=2e-2, atol=2e-2)

        if check_no_weights:
            out2 = multi_head_attention(query, key_t, value, params,
                                        num_heads=H, need_weights=False)
            jax.block_until_ready(out2)
            np.testing.assert_allclose(np.asarray(out2), np.asarray(ref_out),
                                       rtol=2e-2, atol=2e-2)

    # 1) small shapes consistent with the module (single head group, single tile)
    run_case(B=2, T=8, S=8, E=32, H=4, seed=0, check_no_weights=True)
    # 2) multiple head groups (D=128 -> one head per group, two groups)
    run_case(B=2, T=16, S=16, E=256, H=2, seed=1)
    # 3) query tiling + padding (T=300 -> padded to 384, 3 tiles, K/V cache reuse)
    run_case(B=1, T=300, S=32, E=64, H=2, seed=2)

    print("KERNEL_OK")
</pallas_src>

<mosaic_0001>
module attributes {stable_mosaic.version = 11 : i64} {
  func.func @_mha_kernel(%arg0: i32, %arg1: i32, %arg2: i32, %arg3: memref<1x8x32xbf16, #tpu.memory_space<vmem>>, %arg4: memref<1x8x32xbf16, #tpu.memory_space<vmem>>, %arg5: memref<1x8x32xbf16, #tpu.memory_space<vmem>>, %arg6: memref<1x32x32xbf16, #tpu.memory_space<vmem>>, %arg7: memref<1x1x32xf32, #tpu.memory_space<vmem>>, %arg8: memref<1x32x32xbf16, #tpu.memory_space<vmem>>, %arg9: memref<1x1x32xf32, #tpu.memory_space<vmem>>, %arg10: memref<1x32x32xbf16, #tpu.memory_space<vmem>>, %arg11: memref<1x1x32xf32, #tpu.memory_space<vmem>>, %arg12: memref<32x32xbf16, #tpu.memory_space<vmem>>, %arg13: memref<1x32xf32, #tpu.memory_space<vmem>>, %arg14: memref<1x8x32xf32, #tpu.memory_space<vmem>>, %arg15: memref<1x4x8x8xf32, #tpu.memory_space<vmem>>, %arg16: memref<1x8x32xbf16, #tpu.memory_space<vmem>>, %arg17: memref<1x8x32xbf16, #tpu.memory_space<vmem>>, %arg18: memref<1x8x32xf32, #tpu.memory_space<vmem>>) attributes {dimension_semantics = [#tpu.dimension_semantics<parallel>, #tpu.dimension_semantics<arbitrary>, #tpu.dimension_semantics<arbitrary>], iteration_bounds = array<i64: 2, 1, 1>, scalar_prefetch = 0 : i64, scratch_operands = 3 : i64, tpu.core_type = #tpu.core_type<tc>, window_params = [{transform_indices = @transform_0, window_bounds = array<i64: 1, 8, 32>}, {pipeline_mode = #tpu.pipeline_mode<synchronous>, transform_indices = @transform_1, window_bounds = array<i64: 1, 8, 32>}, {pipeline_mode = #tpu.pipeline_mode<synchronous>, transform_indices = @transform_2, window_bounds = array<i64: 1, 8, 32>}, {pipeline_mode = #tpu.pipeline_mode<synchronous>, transform_indices = @transform_3, window_bounds = array<i64: 1, 32, 32>}, {pipeline_mode = #tpu.pipeline_mode<synchronous>, transform_indices = @transform_4, window_bounds = array<i64: 1, 1, 32>}, {pipeline_mode = #tpu.pipeline_mode<synchronous>, transform_indices = @transform_5, window_bounds = array<i64: 1, 32, 32>}, {pipeline_mode = #tpu.pipeline_mode<synchronous>, transform_indices = @transform_6, window_bounds = array<i64: 1, 1, 32>}, {pipeline_mode = #tpu.pipeline_mode<synchronous>, transform_indices = @transform_7, window_bounds = array<i64: 1, 32, 32>}, {pipeline_mode = #tpu.pipeline_mode<synchronous>, transform_indices = @transform_8, window_bounds = array<i64: 1, 1, 32>}, {pipeline_mode = #tpu.pipeline_mode<synchronous>, transform_indices = @transform_9, window_bounds = array<i64: 32, 32>}, {pipeline_mode = #tpu.pipeline_mode<synchronous>, transform_indices = @transform_10, window_bounds = array<i64: 1, 32>}, {transform_indices = @transform_11, window_bounds = array<i64: 1, 8, 32>}, {transform_indices = @transform_12, window_bounds = array<i64: 1, 4, 8, 8>}]} {
    %c0_i32 = arith.constant 0 : i32
    %0 = arith.cmpi eq, %arg1, %c0_i32 : i32
    %1 = arith.extui %0 : i1 to i32
    %c0_i32_0 = arith.constant 0 : i32
    %2 = arith.cmpi ne, %1, %c0_i32_0 : i32
    scf.if %2 {
      %c0_44 = arith.constant 0 : index
      %c0_45 = arith.constant 0 : index
      %c0_46 = arith.constant 0 : index
      %101 = vector.load %arg4[%c0_44, %c0_45, %c0_46] : memref<1x8x32xbf16, #tpu.memory_space<vmem>>, vector<1x8x32xbf16>
      %102 = vector.shape_cast %101 : vector<1x8x32xbf16> to vector<8x32xbf16>
      %c0_47 = arith.constant 0 : index
      %c0_48 = arith.constant 0 : index
      %c0_49 = arith.constant 0 : index
      %103 = vector.load %arg5[%c0_47, %c0_48, %c0_49] : memref<1x8x32xbf16, #tpu.memory_space<vmem>>, vector<1x8x32xbf16>
      %104 = vector.shape_cast %103 : vector<1x8x32xbf16> to vector<8x32xbf16>
      %105 = arith.index_cast %arg2 : i32 to index
      %c0_50 = arith.constant 0 : index
      %c0_51 = arith.constant 0 : index
      %106 = vector.load %arg8[%105, %c0_50, %c0_51] : memref<1x32x32xbf16, #tpu.memory_space<vmem>>, vector<1x32x32xbf16>
      %107 = vector.shape_cast %106 : vector<1x32x32xbf16> to vector<32x32xbf16>
      %cst_52 = arith.constant dense<0.000000e+00> : vector<8x32xf32>
      %108 = tpu.matmul %102, %107, %cst_52 {dimension_numbers = #tpu.dot_dimension_numbers<[1], [0], [0], [1], [0, 0, 1, 1], [], []>} : vector<8x32xbf16>, vector<32x32xbf16>, vector<8x32xf32> -> vector<8x32xf32>
      %109 = arith.index_cast %arg2 : i32 to index
      %c0_53 = arith.constant 0 : index
      %c0_54 = arith.constant 0 : index
      %110 = vector.load %arg9[%109, %c0_53, %c0_54] : memref<1x1x32xf32, #tpu.memory_space<vmem>>, vector<1x1x32xf32>
      %111 = vector.shape_cast %110 : vector<1x1x32xf32> to vector<1x32xf32>
      %112 = vector.broadcast %111 : vector<1x32xf32> to vector<8x32xf32>
      %113 = arith.addf %108, %112 : vector<8x32xf32>
      %114 = arith.index_cast %arg2 : i32 to index
      %c0_55 = arith.constant 0 : index
      %c0_56 = arith.constant 0 : index
      %115 = vector.load %arg10[%114, %c0_55, %c0_56] : memref<1x32x32xbf16, #tpu.memory_space<vmem>>, vector<1x32x32xbf16>
      %116 = vector.shape_cast %115 : vector<1x32x32xbf16> to vector<32x32xbf16>
      %cst_57 = arith.constant dense<0.000000e+00> : vector<8x32xf32>
      %117 = tpu.matmul %104, %116, %cst_57 {dimension_numbers = #tpu.dot_dimension_numbers<[1], [0], [0], [1], [0, 0, 1, 1], [], []>} : vector<8x32xbf16>, vector<32x32xbf16>, vector<8x32xf32> -> vector<8x32xf32>
      %118 = arith.index_cast %arg2 : i32 to index
      %c0_58 = arith.constant 0 : index
      %c0_59 = arith.constant 0 : index
      %119 = vector.load %arg11[%118, %c0_58, %c0_59] : memref<1x1x32xf32, #tpu.memory_space<vmem>>, vector<1x1x32xf32>
      %120 = vector.shape_cast %119 : vector<1x1x32xf32> to vector<1x32xf32>
      %121 = vector.broadcast %120 : vector<1x32xf32> to vector<8x32xf32>
      %122 = arith.addf %117, %121 : vector<8x32xf32>
      %123 = arith.truncf %113 : vector<8x32xf32> to vector<8x32xbf16>
      %124 = arith.index_cast %arg2 : i32 to index
      %c0_60 = arith.constant 0 : index
      %c0_61 = arith.constant 0 : index
      %125 = vector.load %arg16[%124, %c0_60, %c0_61] : memref<1x8x32xbf16, #tpu.memory_space<vmem>>, vector<1x8x32xbf16>
      %126 = vector.shape_cast %125 : vector<1x8x32xbf16> to vector<8x32xbf16>
      %127 = vector.shape_cast %123 : vector<8x32xbf16> to vector<1x8x32xbf16>
      tpu.vector_store %arg16[%124, %c0_60, %c0_61], %127 {strides = array<i32>} : memref<1x8x32xbf16, #tpu.memory_space<vmem>>, vector<1x8x32xbf16>,
      %128 = arith.truncf %122 : vector<8x32xf32> to vector<8x32xbf16>
      %129 = arith.index_cast %arg2 : i32 to index
      %c0_62 = arith.constant 0 : index
      %c0_63 = arith.constant 0 : index
      %130 = vector.load %arg17[%129, %c0_62, %c0_63] : memref<1x8x32xbf16, #tpu.memory_space<vmem>>, vector<1x8x32xbf16>
      %131 = vector.shape_cast %130 : vector<1x8x32xbf16> to vector<8x32xbf16>
      %132 = vector.shape_cast %128 : vector<8x32xbf16> to vector<1x8x32xbf16>
      tpu.vector_store %arg17[%129, %c0_62, %c0_63], %132 {strides = array<i32>} : memref<1x8x32xbf16, #tpu.memory_space<vmem>>, vector<1x8x32xbf16>,
    } else {
    }
    %c0 = arith.constant 0 : index
    %c0_1 = arith.constant 0 : index
    %c0_2 = arith.constant 0 : index
    %3 = vector.load %arg3[%c0, %c0_1, %c0_2] : memref<1x8x32xbf16, #tpu.memory_space<vmem>>, vector<1x8x32xbf16>
    %4 = vector.shape_cast %3 : vector<1x8x32xbf16> to vector<8x32xbf16>
    %5 = arith.index_cast %arg2 : i32 to index
    %c0_3 = arith.constant 0 : index
    %c0_4 = arith.constant 0 : index
    %6 = vector.load %arg6[%5, %c0_3, %c0_4] : memref<1x32x32xbf16, #tpu.memory_space<vmem>>, vector<1x32x32xbf16>
    %7 = vector.shape_cast %6 : vector<1x32x32xbf16> to vector<32x32xbf16>
    %cst = arith.constant dense<0.000000e+00> : vector<8x32xf32>
    %8 = tpu.matmul %4, %7, %cst {dimension_numbers = #tpu.dot_dimension_numbers<[1], [0], [0], [1], [0, 0, 1, 1], [], []>} : vector<8x32xbf16>, vector<32x32xbf16>, vector<8x32xf32> -> vector<8x32xf32>
    %9 = arith.index_cast %arg2 : i32 to index
    %c0_5 = arith.constant 0 : index
    %c0_6 = arith.constant 0 : index
    %10 = vector.load %arg7[%9, %c0_5, %c0_6] : memref<1x1x32xf32, #tpu.memory_space<vmem>>, vector<1x1x32xf32>
    %11 = vector.shape_cast %10 : vector<1x1x32xf32> to vector<1x32xf32>
    %12 = vector.broadcast %11 : vector<1x32xf32> to vector<8x32xf32>
    %13 = arith.addf %8, %12 : vector<8x32xf32>
    %14 = arith.truncf %13 : vector<8x32xf32> to vector<8x32xbf16>
    %15 = arith.index_cast %arg2 : i32 to index
    %c0_7 = arith.constant 0 : index
    %c0_8 = arith.constant 0 : index
    %16 = vector.load %arg16[%15, %c0_7, %c0_8] : memref<1x8x32xbf16, #tpu.memory_space<vmem>>, vector<1x8x32xbf16>
    %17 = vector.shape_cast %16 : vector<1x8x32xbf16> to vector<8x32xbf16>
    %18 = arith.index_cast %arg2 : i32 to index
    %c0_9 = arith.constant 0 : index
    %c0_10 = arith.constant 0 : index
    %19 = vector.load %arg17[%18, %c0_9, %c0_10] : memref<1x8x32xbf16, #tpu.memory_space<vmem>>, vector<1x8x32xbf16>
    %20 = vector.shape_cast %19 : vector<1x8x32xbf16> to vector<8x32xbf16>
    %21 = vector.extract_strided_slice %14 {offsets = [0, 0], sizes = [8, 8], strides = [1, 1]} : vector<8x32xbf16> to vector<8x8xbf16>
    %22 = vector.extract_strided_slice %17 {offsets = [0, 0], sizes = [8, 8], strides = [1, 1]} : vector<8x32xbf16> to vector<8x8xbf16>
    %23 = vector.extract_strided_slice %20 {offsets = [0, 0], sizes = [8, 8], strides = [1, 1]} : vector<8x32xbf16> to vector<8x8xbf16>
    %cst_11 = arith.constant dense<0.000000e+00> : vector<8x8xf32>
    %24 = tpu.matmul %21, %22, %cst_11 {dimension_numbers = #tpu.dot_dimension_numbers<[1], [1], [0], [0], [0, 0, 1, 0], [], []>} : vector<8x8xbf16>, vector<8x8xbf16>, vector<8x8xf32> -> vector<8x8xf32>
    %cst_12 = arith.constant dense<0xFF800000> : vector<8xf32>
    %25 = vector.multi_reduction <maximumf>, %24, %cst_12 [1] : vector<8x8xf32> to vector<8xf32>
    %26 = vector.shape_cast %25 : vector<8xf32> to vector<8x1xf32>
    %27 = vector.broadcast %26 : vector<8x1xf32> to vector<8x8xf32>
    %28 = arith.subf %24, %27 : vector<8x8xf32>
    %29 = math.exp %28 : vector<8x8xf32>
    %cst_13 = arith.constant dense<0.000000e+00> : vector<8xf32>
    %30 = vector.multi_reduction <add>, %29, %cst_13 [1] : vector<8x8xf32> to vector<8xf32>
    %31 = vector.shape_cast %30 : vector<8xf32> to vector<8x1xf32>
    %32 = vector.broadcast %31 : vector<8x1xf32> to vector<8x8xf32>
    %33 = arith.divf %29, %32 : vector<8x8xf32>
    %c0_14 = arith.constant 0 : index
    %c0_15 = arith.constant 0 : index
    %c0_16 = arith.constant 0 : index
    %c0_17 = arith.constant 0 : index
    %34 = vector.load %arg15[%c0_14, %c0_15, %c0_16, %c0_17] : memref<1x4x8x8xf32, #tpu.memory_space<vmem>>, vector<1x1x8x8xf32>
    %35 = vector.shape_cast %34 : vector<1x1x8x8xf32> to vector<8x8xf32>
    %36 = vector.shape_cast %33 : vector<8x8xf32> to vector<1x1x8x8xf32>
    tpu.vector_store %arg15[%c0_14, %c0_15, %c0_16, %c0_17], %36 {strides = array<i32>} : memref<1x4x8x8xf32, #tpu.memory_space<vmem>>, vector<1x1x8x8xf32>,
    %37 = arith.truncf %33 : vector<8x8xf32> to vector<8x8xbf16>
    %cst_18 = arith.constant dense<0.000000e+00> : vector<8x8xf32>
    %38 = tpu.matmul %37, %23, %cst_18 {dimension_numbers = #tpu.dot_dimension_numbers<[1], [0], [0], [1], [0, 0, 1, 1], [], []>} : vector<8x8xbf16>, vector<8x8xbf16>, vector<8x8xf32> -> vector<8x8xf32>
    %39 = vector.extract_strided_slice %14 {offsets = [0, 8], sizes = [8, 8], strides = [1, 1]} : vector<8x32xbf16> to vector<8x8xbf16>
    %40 = vector.extract_strided_slice %17 {offsets = [0, 8], sizes = [8, 8], strides = [1, 1]} : vector<8x32xbf16> to vector<8x8xbf16>
    %41 = vector.extract_strided_slice %20 {offsets = [0, 8], sizes = [8, 8], strides = [1, 1]} : vector<8x32xbf16> to vector<8x8xbf16>
    %cst_19 = arith.constant dense<0.000000e+00> : vector<8x8xf32>
    %42 = tpu.matmul %39, %40, %cst_19 {dimension_numbers = #tpu.dot_dimension_numbers<[1], [1], [0], [0], [0, 0, 1, 0], [], []>} : vector<8x8xbf16>, vector<8x8xbf16>, vector<8x8xf32> -> vector<8x8xf32>
    %cst_20 = arith.constant dense<0xFF800000> : vector<8xf32>
    %43 = vector.multi_reduction <maximumf>, %42, %cst_20 [1] : vector<8x8xf32> to vector<8xf32>
    %44 = vector.shape_cast %43 : vector<8xf32> to vector<8x1xf32>
    %45 = vector.broadcast %44 : vector<8x1xf32> to vector<8x8xf32>
    %46 = arith.subf %42, %45 : vector<8x8xf32>
    %47 = math.exp %46 : vector<8x8xf32>
    %cst_21 = arith.constant dense<0.000000e+00> : vector<8xf32>
    %48 = vector.multi_reduction <add>, %47, %cst_21 [1] : vector<8x8xf32> to vector<8xf32>
    %49 = vector.shape_cast %48 : vector<8xf32> to vector<8x1xf32>
    %50 = vector.broadcast %49 : vector<8x1xf32> to vector<8x8xf32>
    %51 = arith.divf %47, %50 : vector<8x8xf32>
    %c0_22 = arith.constant 0 : index
    %c1 = arith.constant 1 : index
    %c0_23 = arith.constant 0 : index
    %c0_24 = arith.constant 0 : index
    %52 = vector.load %arg15[%c0_22, %c1, %c0_23, %c0_24] : memref<1x4x8x8xf32, #tpu.memory_space<vmem>>, vector<1x1x8x8xf32>
    %53 = vector.shape_cast %52 : vector<1x1x8x8xf32> to vector<8x8xf32>
    %54 = vector.shape_cast %51 : vector<8x8xf32> to vector<1x1x8x8xf32>
    tpu.vector_store %arg15[%c0_22, %c1, %c0_23, %c0_24], %54 {strides = array<i32>} : memref<1x4x8x8xf32, #tpu.memory_space<vmem>>, vector<1x1x8x8xf32>,
    %55 = arith.truncf %51 : vector<8x8xf32> to vector<8x8xbf16>
    %cst_25 = arith.constant dense<0.000000e+00> : vector<8x8xf32>
    %56 = tpu.matmul %55, %41, %cst_25 {dimension_numbers = #tpu.dot_dimension_numbers<[1], [0], [0], [1], [0, 0, 1, 1], [], []>} : vector<8x8xbf16>, vector<8x8xbf16>, vector<8x8xf32> -> vector<8x8xf32>
    %57 = vector.extract_strided_slice %14 {offsets = [0, 16], sizes = [8, 8], strides = [1, 1]} : vector<8x32xbf16> to vector<8x8xbf16>
    %58 = vector.extract_strided_slice %17 {offsets = [0, 16], sizes = [8, 8], strides = [1, 1]} : vector<8x32xbf16> to vector<8x8xbf16>
    %59 = vector.extract_strided_slice %20 {offsets = [0, 16], sizes = [8, 8], strides = [1, 1]} : vector<8x32xbf16> to vector<8x8xbf16>
    %cst_26 = arith.constant dense<0.000000e+00> : vector<8x8xf32>
    %60 = tpu.matmul %57, %58, %cst_26 {dimension_numbers = #tpu.dot_dimension_numbers<[1], [1], [0], [0], [0, 0, 1, 0], [], []>} : vector<8x8xbf16>, vector<8x8xbf16>, vector<8x8xf32> -> vector<8x8xf32>
    %cst_27 = arith.constant dense<0xFF800000> : vector<8xf32>
    %61 = vector.multi_reduction <maximumf>, %60, %cst_27 [1] : vector<8x8xf32> to vector<8xf32>
    %62 = vector.shape_cast %61 : vector<8xf32> to vector<8x1xf32>
    %63 = vector.broadcast %62 : vector<8x1xf32> to vector<8x8xf32>
    %64 = arith.subf %60, %63 : vector<8x8xf32>
    %65 = math.exp %64 : vector<8x8xf32>
    %cst_28 = arith.constant dense<0.000000e+00> : vector<8xf32>
    %66 = vector.multi_reduction <add>, %65, %cst_28 [1] : vector<8x8xf32> to vector<8xf32>
    %67 = vector.shape_cast %66 : vector<8xf32> to vector<8x1xf32>
    %68 = vector.broadcast %67 : vector<8x1xf32> to vector<8x8xf32>
    %69 = arith.divf %65, %68 : vector<8x8xf32>
    %c0_29 = arith.constant 0 : index
    %c2 = arith.constant 2 : index
    %c0_30 = arith.constant 0 : index
    %c0_31 = arith.constant 0 : index
    %70 = vector.load %arg15[%c0_29, %c2, %c0_30, %c0_31] : memref<1x4x8x8xf32, #tpu.memory_space<vmem>>, vector<1x1x8x8xf32>
    %71 = vector.shape_cast %70 : vector<1x1x8x8xf32> to vector<8x8xf32>
    %72 = vector.shape_cast %69 : vector<8x8xf32> to vector<1x1x8x8xf32>
    tpu.vector_store %arg15[%c0_29, %c2, %c0_30, %c0_31], %72 {strides = array<i32>} : memref<1x4x8x8xf32, #tpu.memory_space<vmem>>, vector<1x1x8x8xf32>,
    %73 = arith.truncf %69 : vector<8x8xf32> to vector<8x8xbf16>
    %cst_32 = arith.constant dense<0.000000e+00> : vector<8x8xf32>
    %74 = tpu.matmul %73, %59, %cst_32 {dimension_numbers = #tpu.dot_dimension_numbers<[1], [0], [0], [1], [0, 0, 1, 1], [], []>} : vector<8x8xbf16>, vector<8x8xbf16>, vector<8x8xf32> -> vector<8x8xf32>
    %75 = vector.extract_strided_slice %14 {offsets = [0, 24], sizes = [8, 8], strides = [1, 1]} : vector<8x32xbf16> to vector<8x8xbf16>
    %76 = vector.extract_strided_slice %17 {offsets = [0, 24], sizes = [8, 8], strides = [1, 1]} : vector<8x32xbf16> to vector<8x8xbf16>
    %77 = vector.extract_strided_slice %20 {offsets = [0, 24], sizes = [8, 8], strides = [1, 1]} : vector<8x32xbf16> to vector<8x8xbf16>
    %cst_33 = arith.constant dense<0.000000e+00> : vector<8x8xf32>
    %78 = tpu.matmul %75, %76, %cst_33 {dimension_numbers = #tpu.dot_dimension_numbers<[1], [1], [0], [0], [0, 0, 1, 0], [], []>} : vector<8x8xbf16>, vector<8x8xbf16>, vector<8x8xf32> -> vector<8x8xf32>
    %cst_34 = arith.constant dense<0xFF800000> : vector<8xf32>
    %79 = vector.multi_reduction <maximumf>, %78, %cst_34 [1] : vector<8x8xf32> to vector<8xf32>
    %80 = vector.shape_cast %79 : vector<8xf32> to vector<8x1xf32>
    %81 = vector.broadcast %80 : vector<8x1xf32> to vector<8x8xf32>
    %82 = arith.subf %78, %81 : vector<8x8xf32>
    %83 = math.exp %82 : vector<8x8xf32>
    %cst_35 = arith.constant dense<0.000000e+00> : vector<8xf32>
    %84 = vector.multi_reduction <add>, %83, %cst_35 [1] : vector<8x8xf32> to vector<8xf32>
    %85 = vector.shape_cast %84 : vector<8xf32> to vector<8x1xf32>
    %86 = vector.broadcast %85 : vector<8x1xf32> to vector<8x8xf32>
    %87 = arith.divf %83, %86 : vector<8x8xf32>
    %c0_36 = arith.constant 0 : index
    %c3 = arith.constant 3 : index
    %c0_37 = arith.constant 0 : index
    %c0_38 = arith.constant 0 : index
    %88 = vector.load %arg15[%c0_36, %c3, %c0_37, %c0_38] : memref<1x4x8x8xf32, #tpu.memory_space<vmem>>, vector<1x1x8x8xf32>
    %89 = vector.shape_cast %88 : vector<1x1x8x8xf32> to vector<8x8xf32>
    %90 = vector.shape_cast %87 : vector<8x8xf32> to vector<1x1x8x8xf32>
    tpu.vector_store %arg15[%c0_36, %c3, %c0_37, %c0_38], %90 {strides = array<i32>} : memref<1x4x8x8xf32, #tpu.memory_space<vmem>>, vector<1x1x8x8xf32>,
    %91 = arith.truncf %87 : vector<8x8xf32> to vector<8x8xbf16>
    %cst_39 = arith.constant dense<0.000000e+00> : vector<8x8xf32>
    %92 = tpu.matmul %91, %77, %cst_39 {dimension_numbers = #tpu.dot_dimension_numbers<[1], [0], [0], [1], [0, 0, 1, 1], [], []>} : vector<8x8xbf16>, vector<8x8xbf16>, vector<8x8xf32> -> vector<8x8xf32>
    %93 = tpu.concatenate %38, %56, %74, %92 in 1 : vector<8x8xf32>, vector<8x8xf32>, vector<8x8xf32>, vector<8x8xf32> -> vector<8x32xf32>
    %94 = arith.index_cast %arg2 : i32 to index
    %c0_40 = arith.constant 0 : index
    %c0_41 = arith.constant 0 : index
    %95 = vector.load %arg18[%94, %c0_40, %c0_41] : memref<1x8x32xf32, #tpu.memory_space<vmem>>, vector<1x8x32xf32>
    %96 = vector.shape_cast %95 : vector<1x8x32xf32> to vector<8x32xf32>
    %97 = vector.shape_cast %93 : vector<8x32xf32> to vector<1x8x32xf32>
    tpu.vector_store %arg18[%94, %c0_40, %c0_41], %97 {strides = array<i32>} : memref<1x8x32xf32, #tpu.memory_space<vmem>>, vector<1x8x32xf32>,
    %c0_i32_42 = arith.constant 0 : i32
    %98 = arith.cmpi eq, %arg2, %c0_i32_42 : i32
    %99 = arith.extui %98 : i1 to i32
    %c0_i32_43 = arith.constant 0 : i32
    %100 = arith.cmpi ne, %99, %c0_i32_43 : i32
    scf.if %100 {
      %c0_44 = arith.constant 0 : index
      %c0_45 = arith.constant 0 : index
      %c0_46 = arith.constant 0 : index
      %101 = vector.load %arg18[%c0_44, %c0_45, %c0_46] : memref<1x8x32xf32, #tpu.memory_space<vmem>>, vector<1x8x32xf32>
      %102 = vector.shape_cast %101 : vector<1x8x32xf32> to vector<8x32xf32>
      %103 = arith.truncf %102 : vector<8x32xf32> to vector<8x32xbf16>
      %c0_47 = arith.constant 0 : index
      %c0_48 = arith.constant 0 : index
      %104 = vector.load %arg12[%c0_47, %c0_48] : memref<32x32xbf16, #tpu.memory_space<vmem>>, vector<32x32xbf16>
      %cst_49 = arith.constant dense<0.000000e+00> : vector<8x32xf32>
      %105 = tpu.matmul %103, %104, %cst_49 {dimension_numbers = #tpu.dot_dimension_numbers<[1], [0], [0], [1], [0, 0, 1, 1], [], []>} : vector<8x32xbf16>, vector<32x32xbf16>, vector<8x32xf32> -> vector<8x32xf32>
      %c0_50 = arith.constant 0 : index
      %c0_51 = arith.constant 0 : index
      %106 = vector.load %arg13[%c0_50, %c0_51] : memref<1x32xf32, #tpu.memory_space<vmem>>, vector<1x32xf32>
      %107 = vector.broadcast %106 : vector<1x32xf32> to vector<8x32xf32>
      %108 = arith.addf %105, %107 : vector<8x32xf32>
      %c0_52 = arith.constant 0 : index
      %c0_53 = arith.constant 0 : index
      %c0_54 = arith.constant 0 : index
      %109 = vector.load %arg14[%c0_52, %c0_53, %c0_54] : memref<1x8x32xf32, #tpu.memory_space<vmem>>, vector<1x8x32xf32>
      %110 = vector.shape_cast %109 : vector<1x8x32xf32> to vector<8x32xf32>
      %111 = vector.shape_cast %108 : vector<8x32xf32> to vector<1x8x32xf32>
      tpu.vector_store %arg14[%c0_52, %c0_53, %c0_54], %111 {strides = array<i32>} : memref<1x8x32xf32, #tpu.memory_space<vmem>>, vector<1x8x32xf32>,
    } else {
    }
    return
  }
  func.func @transform_0(%arg0: i32, %arg1: i32, %arg2: i32) -> (i32, i32, i32) {
    %c0_i32 = arith.constant 0 : i32
    %c0_i32_0 = arith.constant 0 : i32
    return %arg0, %arg1, %c0_i32 : i32, i32, i32
  }
  func.func @transform_1(%arg0: i32, %arg1: i32, %arg2: i32) -> (i32, i32, i32) {
    %c0_i32 = arith.constant 0 : i32
    %c0_i32_0 = arith.constant 0 : i32
    %c0_i32_1 = arith.constant 0 : i32
    return %arg0, %c0_i32, %c0_i32_0 : i32, i32, i32
  }
  func.func @transform_2(%arg0: i32, %arg1: i32, %arg2: i32) -> (i32, i32, i32) {
    %c0_i32 = arith.constant 0 : i32
    %c0_i32_0 = arith.constant 0 : i32
    %c0_i32_1 = arith.constant 0 : i32
    return %arg0, %c0_i32, %c0_i32_0 : i32, i32, i32
  }
  func.func @transform_3(%arg0: i32, %arg1: i32, %arg2: i32) -> (i32, i32, i32) {
    %c0_i32 = arith.constant 0 : i32
    %c0_i32_0 = arith.constant 0 : i32
    %c0_i32_1 = arith.constant 0 : i32
    %c0_i32_2 = arith.constant 0 : i32
    return %c0_i32, %c0_i32_0, %c0_i32_1 : i32, i32, i32
  }
  func.func @transform_4(%arg0: i32, %arg1: i32, %arg2: i32) -> (i32, i32, i32) {
    %c0_i32 = arith.constant 0 : i32
    %c0_i32_0 = arith.constant 0 : i32
    %c0_i32_1 = arith.constant 0 : i32
    %c0_i32_2 = arith.constant 0 : i32
    return %c0_i32, %c0_i32_0, %c0_i32_1 : i32, i32, i32
  }
  func.func @transform_5(%arg0: i32, %arg1: i32, %arg2: i32) -> (i32, i32, i32) {
    %c0_i32 = arith.constant 0 : i32
    %c0_i32_0 = arith.constant 0 : i32
    %c0_i32_1 = arith.constant 0 : i32
    %c0_i32_2 = arith.constant 0 : i32
    return %c0_i32, %c0_i32_0, %c0_i32_1 : i32, i32, i32
  }
  func.func @transform_6(%arg0: i32, %arg1: i32, %arg2: i32) -> (i32, i32, i32) {
    %c0_i32 = arith.constant 0 : i32
    %c0_i32_0 = arith.constant 0 : i32
    %c0_i32_1 = arith.constant 0 : i32
    %c0_i32_2 = arith.constant 0 : i32
    return %c0_i32, %c0_i32_0, %c0_i32_1 : i32, i32, i32
  }
  func.func @transform_7(%arg0: i32, %arg1: i32, %arg2: i32) -> (i32, i32, i32) {
    %c0_i32 = arith.constant 0 : i32
    %c0_i32_0 = arith.constant 0 : i32
    %c0_i32_1 = arith.constant 0 : i32
    %c0_i32_2 = arith.constant 0 : i32
    return %c0_i32, %c0_i32_0, %c0_i32_1 : i32, i32, i32
  }
  func.func @transform_8(%arg0: i32, %arg1: i32, %arg2: i32) -> (i32, i32, i32) {
    %c0_i32 = arith.constant 0 : i32
    %c0_i32_0 = arith.constant 0 : i32
    %c0_i32_1 = arith.constant 0 : i32
    %c0_i32_2 = arith.constant 0 : i32
    return %c0_i32, %c0_i32_0, %c0_i32_1 : i32, i32, i32
  }
  func.func @transform_9(%arg0: i32, %arg1: i32, %arg2: i32) -> (i32, i32) {
    %c0_i32 = arith.constant 0 : i32
    %c0_i32_0 = arith.constant 0 : i32
    %c0_i32_1 = arith.constant 0 : i32
    return %c0_i32, %c0_i32_0 : i32, i32
  }
  func.func @transform_10(%arg0: i32, %arg1: i32, %arg2: i32) -> (i32, i32) {
    %c0_i32 = arith.constant 0 : i32
    %c0_i32_0 = arith.constant 0 : i32
    %c0_i32_1 = arith.constant 0 : i32
    return %c0_i32, %c0_i32_0 : i32, i32
  }
  func.func @transform_11(%arg0: i32, %arg1: i32, %arg2: i32) -> (i32, i32, i32) {
    %c0_i32 = arith.constant 0 : i32
    %c0_i32_0 = arith.constant 0 : i32
    return %arg0, %arg1, %c0_i32 : i32, i32, i32
  }
  func.func @transform_12(%arg0: i32, %arg1: i32, %arg2: i32) -> (i32, i32, i32, i32) {
    %c0_i32 = arith.constant 0 : i32
    %c0_i32_0 = arith.constant 0 : i32
    return %arg0, %arg2, %arg1, %c0_i32 : i32, i32, i32, i32
  }
}

</mosaic_0001>

<llo_original>
// kernel: tpu_custom_call.1
$region0: #{tpu_custom_call.1}
  #allocation0 [shape = 'u32[]', space=smem, size = 0x4, offset = 0x4, fixed_abs, tag = 'smem constant byte address 0x4 - core index']
  #allocation1 [shape = 'u32[144,128]{1,0:T(1,128)}', space=vmem, size = 0x12000, scoped, tag = 'internal scratch']
  #allocation2 [shape = 'bf16[1,8,32]{2,1,0:T(8,128)(2,1)}', space=vmem, size = 0x800, scoped, tag = 'scratch operand']
  #allocation3 [shape = 'bf16[1,8,32]{2,1,0:T(8,128)(2,1)}', space=vmem, size = 0x800, scoped, tag = 'scratch operand']
  #allocation4 [shape = 'f32[1,8,32]{2,1,0:T(8,128)}', space=vmem, size = 0x1000, scoped, tag = 'scratch operand']
  %s0 = inlined_call_operand.hbm [shape: bf16[2,8,32], index: 0, kind: input, shape index: {}]
  %s1 = inlined_call_operand.hbm [shape: bf16[2,8,32], index: 1, kind: input, shape index: {}]
  %s2 = inlined_call_operand.hbm [shape: bf16[2,8,32], index: 2, kind: input, shape index: {}]
  %s3 = inlined_call_operand.hbm [shape: bf16[1,32,32], index: 3, kind: input, shape index: {}]
  %s4 = inlined_call_operand.vmem [shape: f32[1,1,32], index: 4, kind: input, shape index: {}]
  %s5 = inlined_call_operand.vmem [shape: bf16[1,32,32], index: 5, kind: input, shape index: {}]
  %s6 = inlined_call_operand.vmem [shape: f32[1,1,32], index: 6, kind: input, shape index: {}]
  %s7 = inlined_call_operand.hbm [shape: bf16[1,32,32], index: 7, kind: input, shape index: {}]
  %s8 = inlined_call_operand.hbm [shape: f32[1,1,32], index: 8, kind: input, shape index: {}]
  %s9 = inlined_call_operand.vmem [shape: bf16[32,32], index: 9, kind: input, shape index: {}]
  %s10 = inlined_call_operand.vmem [shape: f32[1,32], index: 10, kind: input, shape index: {}]
  %s11 = inlined_call_operand.hbm [shape: f32[2,8,32], index: 11, kind: output, shape index: {0}]
  %s12 = inlined_call_operand.hbm [shape: f32[2,4,8,8], index: 12, kind: output, shape index: {1}]
  %13 = xla_tuple %s11, %s12
  %s14 = sld [smem:[#allocation0]]
  $region117: #{tpu_custom_call.1} parent=0
    _
  %s16 = ssub.s32 1, %s14
  %s17 = scalar_select 0, %s16, %s14
  $region1: #{tpu_custom_call.1} parent=0
    #allocation5 [shape = 'u8[4096]{0}', space=vmem, size = 0x1000, scoped, tag = 'input window, operand 0']
    #allocation6 [shape = 's32[2]{0}', space=sflag, size = 0x8, scoped, tag = 'scoped memory for tpu_custom_call.1']
    #allocation7 [shape = 's32[2]{0}', space=sflag, size = 0x8, scoped, tag = 'scoped memory for tpu_custom_call.1']
    #allocation8 [shape = 'u8[2048]{0}', space=vmem, size = 0x800, scoped, tag = 'input window, operand 1, single buffered']
    #allocation9 [shape = 's32[1]{0}', space=sflag, size = 0x4, scoped, tag = 'scoped memory for tpu_custom_call.1']
    #allocation10 [shape = 'u8[2048]{0}', space=vmem, size = 0x800, scoped, tag = 'input window, operand 2, single buffered']
    #allocation11 [shape = 'u8[8192]{0}', space=vmem, size = 0x2000, scoped, tag = 'input window, operand 3, single buffered']
    #allocation12 [shape = 's32[1]{0}', space=sflag, size = 0x4, scoped, tag = 'scoped memory for tpu_custom_call.1']
    #allocation13 [shape = 'u8[8192]{0}', space=vmem, size = 0x2000, scoped, tag = 'input window, operand 7, single buffered']
    #allocation14 [shape = 'u8[512]{0}', space=vmem, size = 0x400, scoped, tag = 'input window, operand 8, single buffered']
    #allocation15 [shape = 's32[1]{0}', space=sflag, size = 0x4, scoped, tag = 'scoped memory for tpu_custom_call.1']
    #allocation16 [shape = 'u8[8192]{0}', space=vmem, size = 0x2000, scoped, tag = 'output window, operand 0']
    #allocation17 [shape = 'u8[32768]{0}', space=vmem, size = 0x8000, scoped, tag = 'output window, operand 1']
    #allocation18 [shape = 's32[2]{0}', space=sflag, size = 0x8, scoped, tag = 'scoped memory for tpu_custom_call.1']
    %18 = vsyncpa [#allocation6], 0
    %s19 = scalar_lea.sflag [#allocation6], 1
    %20 = vsyncpa %s19, 0
    %21 = vsyncpa [#allocation9], 0
    %22 = vsyncpa [#allocation12], 0
    %23 = vsyncpa [#allocation15], 0
    %24 = vsyncpa [#allocation7], 0
    %s25 = scalar_lea.sflag [#allocation7], 1
    %26 = vsyncpa %s25, 0
    %27 = vsyncpa [#allocation18], 0
    %s28 = scalar_lea.sflag [#allocation18], 1
    %29 = vsyncpa %s28, 0
    loop: start=0, step=1, limit=4
    $region2: #{tpu_custom_call.1} parent=1 // loop_pre_header
      _
    $region3: #{tpu_custom_call.1} parent=1 // loop_header
      %s31 = sphi 0, %s35
      %p32 = scmp.ge.s32.totalorder %s31, 4
      %s38 = sphi 0, %s57
      %s39 = sphi 0, %s53
      %s40 = sphi 0, %s49
      %s41 = sphi 0, %s38
      %s42 = sphi 0, %s39
      %s43 = sphi 0, %s40
      %s44 = sphi 0, %s41
      %s45 = sphi 0, %s42
      %s46 = sphi 0, %s43
      %s62 = sphi 0, %s64
      %s65 = sphi 0, %s62
      %s66 = sphi 0, %s65
      %s82 = sphi 0, %s66
      %s88 = sphi 0, %s90
      %s91 = sphi 0, %s88
      %s92 = sphi 0, %s91
      %s108 = sphi 0, %s92
      %s114 = sphi 0, %s116
      %s117 = sphi 0, %s114
      %s118 = sphi 0, %s117
      %s134 = sphi 0, %s118
      %s138 = sphi 0, %s138
      %s140 = sphi 0, %s138
      %s141 = sphi 0, %s140
      %s155 = sphi 0, %s141
      %s159 = sphi 0, %s159
      %s161 = sphi 0, %s159
      %s162 = sphi 0, %s161
      %s176 = sphi 0, %s162
      %s180 = sphi 0, %s180
      %s182 = sphi 0, %s180
      %s183 = sphi 0, %s182
      %s197 = sphi 0, %s183
      %s201 = sphi 0, %s201
      %s203 = sphi 0, %s201
      %s204 = sphi 0, %s203
      %s218 = sphi 0, %s204
      %s222 = sphi 0, %s222
      %s224 = sphi 0, %s222
      %s225 = sphi 0, %s224
      %s239 = sphi 0, %s225
      %s243 = sphi 0, %s243
      %s245 = sphi 0, %s243
      %s246 = sphi 0, %s245
      %s260 = sphi 0, %s246
      %s264 = sphi 0, %s264
      %s266 = sphi 0, %s264
      %s267 = sphi 0, %s266
      %s281 = sphi 0, %s267
      %s285 = sphi 0, %s285
      %s287 = sphi 0, %s285
      %s288 = sphi 0, %s287
      %s302 = sphi 0, %s288
      %s310 = sphi 0, %s312
      %s313 = sphi 0, %s310
      %s314 = sphi 0, %s313
      %s330 = sphi 0, %s314
      %s340 = sphi 0, %s342
      %s343 = sphi 0, %s340
      %s344 = sphi 0, %s343
      %s360 = sphi 0, %s344
    $region4: #{tpu_custom_call.1} parent=1 // loop_header_branch
      %34 = sbr.rel (%p32) target = $region8
    $region5: #{tpu_custom_call.1} parent=1 // loop_body
      %s36 = ssub.s32 %s31, 1
      %s37 = ssub.s32 %s31, 2
      %s47 = sadd.s32 1, %s40
      %p48 = scmp.ge.s32.totalorder %s47, 1
      %s49 = scalar_select %p48, 0, %s47
      %s50 = sadd.s32 1, %s39
      %s51 = scalar_select %p48, %s50, %s39
      %p52 = scmp.ge.s32.totalorder %s51, 1
      %s53 = scalar_select %p52, 0, %s51
      %s54 = sadd.s32 1, %s38
      %s55 = scalar_select %p52, %s54, %s38
      %p56 = scmp.ge.s32.totalorder %s55, 2
      %s57 = scalar_select %p56, 0, %s55
      %s58 = ssub.s32 %s38, %s57
      %s59 = ssub.s32 %s39, %s53
      %s60 = sor.u32 %s58, %s59
      %p61 = scmp.eq.s32.totalorder %s60, 0
      %s63 = sadd.s32 %s62, 1
      %s64 = scalar_select %p61, %s62, %s63
      %p67 = pneg %p61
      %p68 = scmp.eq.s32.totalorder %s31, 1
      %p69 = por %p67, %p68
      %p70 = scmp.ne.s32.totalorder %s62, %s65
      %p71 = scmp.eq.s32.totalorder %s31, 0
      %p72 = por %p70, %p71
      %p73 = scmp.ne.s32.totalorder %s62, %s65
      %p74 = scmp.eq.s32.totalorder %s36, 1
      %p75 = por %p73, %p74
      %p76 = scmp.ne.s32.totalorder %s65, %s66
      %p77 = scmp.eq.s32.totalorder %s36, 0
      %p78 = por %p76, %p77
      %p79 = scmp.ne.s32.totalorder %s65, %s66
      %p80 = scmp.eq.s32.totalorder %s37, 1
      %p81 = por %p79, %p80
      %p83 = scmp.ne.s32.totalorder %s66, %s82
      %p84 = scmp.eq.s32.totalorder %s37, 0
      %p85 = por %p83, %p84
      %s86 = ssub.s32 %s38, %s57
      %p87 = scmp.eq.s32.totalorder %s86, 0
      %s89 = sadd.s32 %s88, 1
      %s90 = scalar_select %p87, %s88, %s89
      %p93 = pneg %p87
      %p94 = scmp.eq.s32.totalorder %s31, 1
      %p95 = por %p93, %p94
      %p96 = scmp.ne.s32.totalorder %s88, %s91
      %p97 = scmp.eq.s32.totalorder %s31, 0
      %p98 = por %p96, %p97
      %p99 = scmp.ne.s32.totalorder %s88, %s91
      %p100 = scmp.eq.s32.totalorder %s36, 1
      %p101 = por %p99, %p100
      %p102 = scmp.ne.s32.totalorder %s91, %s92
      %p103 = scmp.eq.s32.totalorder %s36, 0
      %p104 = por %p102, %p103
      %p105 = scmp.ne.s32.totalorder %s91, %s92
      %p106 = scmp.eq.s32.totalorder %s37, 1
      %p107 = por %p105, %p106
      %p109 = scmp.ne.s32.totalorder %s92, %s108
      %p110 = scmp.eq.s32.totalorder %s37, 0
      %p111 = por %p109, %p110
      %s112 = ssub.s32 %s38, %s57
      %p113 = scmp.eq.s32.totalorder %s112, 0
      %s115 = sadd.s32 %s114, 1
      %s116 = scalar_select %p113, %s114, %s115
      %p119 = pneg %p113
      %p120 = scmp.eq.s32.totalorder %s31, 1
      %p121 = por %p119, %p120
      %p122 = scmp.ne.s32.totalorder %s114, %s117
      %p123 = scmp.eq.s32.totalorder %s31, 0
      %p124 = por %p122, %p123
      %p125 = scmp.ne.s32.totalorder %s114, %s117
      %p126 = scmp.eq.s32.totalorder %s36, 1
      %p127 = por %p125, %p126
      %p128 = scmp.ne.s32.totalorder %s117, %s118
      %p129 = scmp.eq.s32.totalorder %s36, 0
      %p130 = por %p128, %p129
      %p131 = scmp.ne.s32.totalorder %s117, %s118
      %p132 = scmp.eq.s32.totalorder %s37, 1
      %p133 = por %p131, %p132
      %p135 = scmp.ne.s32.totalorder %s118, %s134
      %p136 = scmp.eq.s32.totalorder %s37, 0
      %p137 = por %p135, %p136
      %s139 = sadd.s32 %s138, 1
      %p142 = scmp.eq.s32.totalorder %s31, 1
      %p143 = scmp.ne.s32.totalorder %s138, %s140
      %p144 = scmp.eq.s32.totalorder %s31, 0
      %p145 = por %p143, %p144
      %p146 = scmp.ne.s32.totalorder %s138, %s140
      %p147 = scmp.eq.s32.totalorder %s36, 1
      %p148 = por %p146, %p147
      %p149 = scmp.ne.s32.totalorder %s140, %s141
      %p150 = scmp.eq.s32.totalorder %s36, 0
      %p151 = por %p149, %p150
      %p152 = scmp.ne.s32.totalorder %s140, %s141
      %p153 = scmp.eq.s32.totalorder %s37, 1
      %p154 = por %p152, %p153
      %p156 = scmp.ne.s32.totalorder %s141, %s155
      %p157 = scmp.eq.s32.totalorder %s37, 0
      %p158 = por %p156, %p157
      %s160 = sadd.s32 %s159, 1
      %p163 = scmp.eq.s32.totalorder %s31, 1
      %p164 = scmp.ne.s32.totalorder %s159, %s161
      %p165 = scmp.eq.s32.totalorder %s31, 0
      %p166 = por %p164, %p165
      %p167 = scmp.ne.s32.totalorder %s159, %s161
      %p168 = scmp.eq.s32.totalorder %s36, 1
      %p169 = por %p167, %p168
      %p170 = scmp.ne.s32.totalorder %s161, %s162
      %p171 = scmp.eq.s32.totalorder %s36, 0
      %p172 = por %p170, %p171
      %p173 = scmp.ne.s32.totalorder %s161, %s162
      %p174 = scmp.eq.s32.totalorder %s37, 1
      %p175 = por %p173, %p174
      %p177 = scmp.ne.s32.totalorder %s162, %s176
      %p178 = scmp.eq.s32.totalorder %s37, 0
      %p179 = por %p177, %p178
      %s181 = sadd.s32 %s180, 1
      %p184 = scmp.eq.s32.totalorder %s31, 1
      %p185 = scmp.ne.s32.totalorder %s180, %s182
      %p186 = scmp.eq.s32.totalorder %s31, 0
      %p187 = por %p185, %p186
      %p188 = scmp.ne.s32.totalorder %s180, %s182
      %p189 = scmp.eq.s32.totalorder %s36, 1
      %p190 = por %p188, %p189
      %p191 = scmp.ne.s32.totalorder %s182, %s183
      %p192 = scmp.eq.s32.totalorder %s36, 0
      %p193 = por %p191, %p192
      %p194 = scmp.ne.s32.totalorder %s182, %s183
      %p195 = scmp.eq.s32.totalorder %s37, 1
      %p196 = por %p194, %p195
      %p198 = scmp.ne.s32.totalorder %s183, %s197
      %p199 = scmp.eq.s32.totalorder %s37, 0
      %p200 = por %p198, %p199
      %s202 = sadd.s32 %s201, 1
      %p205 = scmp.eq.s32.totalorder %s31, 1
      %p206 = scmp.ne.s32.totalorder %s201, %s203
      %p207 = scmp.eq.s32.totalorder %s31, 0
      %p208 = por %p206, %p207
      %p209 = scmp.ne.s32.totalorder %s201, %s203
      %p210 = scmp.eq.s32.totalorder %s36, 1
      %p211 = por %p209, %p210
      %p212 = scmp.ne.s32.totalorder %s203, %s204
      %p213 = scmp.eq.s32.totalorder %s36, 0
      %p214 = por %p212, %p213
      %p215 = scmp.ne.s32.totalorder %s203, %s204
      %p216 = scmp.eq.s32.totalorder %s37, 1
      %p217 = por %p215, %p216
      %p219 = scmp.ne.s32.totalorder %s204, %s218
      %p220 = scmp.eq.s32.totalorder %s37, 0
      %p221 = por %p219, %p220
      %s223 = sadd.s32 %s222, 1
      %p226 = scmp.eq.s32.totalorder %s31, 1
      %p227 = scmp.ne.s32.totalorder %s222, %s224
      %p228 = scmp.eq.s32.totalorder %s31, 0
      %p229 = por %p227, %p228
      %p230 = scmp.ne.s32.totalorder %s222, %s224
      %p231 = scmp.eq.s32.totalorder %s36, 1
      %p232 = por %p230, %p231
      %p233 = scmp.ne.s32.totalorder %s224, %s225
      %p234 = scmp.eq.s32.totalorder %s36, 0
      %p235 = por %p233, %p234
      %p236 = scmp.ne.s32.totalorder %s224, %s225
      %p237 = scmp.eq.s32.totalorder %s37, 1
      %p238 = por %p236, %p237
      %p240 = scmp.ne.s32.totalorder %s225, %s239
      %p241 = scmp.eq.s32.totalorder %s37, 0
      %p242 = por %p240, %p241
      %s244 = sadd.s32 %s243, 1
      %p247 = scmp.eq.s32.totalorder %s31, 1
      %p248 = scmp.ne.s32.totalorder %s243, %s245
      %p249 = scmp.eq.s32.totalorder %s31, 0
      %p250 = por %p248, %p249
      %p251 = scmp.ne.s32.totalorder %s243, %s245
      %p252 = scmp.eq.s32.totalorder %s36, 1
      %p253 = por %p251, %p252
      %p254 = scmp.ne.s32.totalorder %s245, %s246
      %p255 = scmp.eq.s32.totalorder %s36, 0
      %p256 = por %p254, %p255
      %p257 = scmp.ne.s32.totalorder %s245, %s246
      %p258 = scmp.eq.s32.totalorder %s37, 1
      %p259 = por %p257, %p258
      %p261 = scmp.ne.s32.totalorder %s246, %s260
      %p262 = scmp.eq.s32.totalorder %s37, 0
      %p263 = por %p261, %p262
      %s265 = sadd.s32 %s264, 1
      %p268 = scmp.eq.s32.totalorder %s31, 1
      %p269 = scmp.ne.s32.totalorder %s264, %s266
      %p270 = scmp.eq.s32.totalorder %s31, 0
      %p271 = por %p269, %p270
      %p272 = scmp.ne.s32.totalorder %s264, %s266
      %p273 = scmp.eq.s32.totalorder %s36, 1
      %p274 = por %p272, %p273
      %p275 = scmp.ne.s32.totalorder %s266, %s267
      %p276 = scmp.eq.s32.totalorder %s36, 0
      %p277 = por %p275, %p276
      %p278 = scmp.ne.s32.totalorder %s266, %s267
      %p279 = scmp.eq.s32.totalorder %s37, 1
      %p280 = por %p278, %p279
      %p282 = scmp.ne.s32.totalorder %s267, %s281
      %p283 = scmp.eq.s32.totalorder %s37, 0
      %p284 = por %p282, %p283
      %s286 = sadd.s32 %s285, 1
      %p289 = scmp.eq.s32.totalorder %s31, 1
      %p290 = scmp.ne.s32.totalorder %s285, %s287
      %p291 = scmp.eq.s32.totalorder %s31, 0
      %p292 = por %p290, %p291
      %p293 = scmp.ne.s32.totalorder %s285, %s287
      %p294 = scmp.eq.s32.totalorder %s36, 1
      %p295 = por %p293, %p294
      %p296 = scmp.ne.s32.totalorder %s287, %s288
      %p297 = scmp.eq.s32.totalorder %s36, 0
      %p298 = por %p296, %p297
      %p299 = scmp.ne.s32.totalorder %s287, %s288
      %p300 = scmp.eq.s32.totalorder %s37, 1
      %p301 = por %p299, %p300
      %p303 = scmp.ne.s32.totalorder %s288, %s302
      %p304 = scmp.eq.s32.totalorder %s37, 0
      %p305 = por %p303, %p304
      %s306 = ssub.s32 %s38, %s57
      %s307 = ssub.s32 %s39, %s53
      %s308 = sor.u32 %s306, %s307
      %p309 = scmp.eq.s32.totalorder %s308, 0
      %s311 = sadd.s32 %s310, 1
      %s312 = scalar_select %p309, %s310, %s311
      %p315 = pneg %p309
      %p316 = scmp.eq.s32.totalorder %s31, 1
      %p317 = por %p315, %p316
      %p318 = scmp.ne.s32.totalorder %s310, %s313
      %p319 = scmp.eq.s32.totalorder %s31, 0
      %p320 = por %p318, %p319
      %p321 = scmp.ne.s32.totalorder %s310, %s313
      %p322 = scmp.eq.s32.totalorder %s36, 1
      %p323 = por %p321, %p322
      %p324 = scmp.ne.s32.totalorder %s313, %s314
      %p325 = scmp.eq.s32.totalorder %s36, 0
      %p326 = por %p324, %p325
      %p327 = scmp.ne.s32.totalorder %s313, %s314
      %p328 = scmp.eq.s32.totalorder %s37, 1
      %p329 = por %p327, %p328
      %p331 = scmp.ne.s32.totalorder %s314, %s330
      %p332 = scmp.eq.s32.totalorder %s37, 0
      %p333 = por %p331, %p332
      %s334 = ssub.s32 %s38, %s57
      %s335 = ssub.s32 %s40, %s49
      %s336 = sor.u32 %s334, %s335
      %s337 = ssub.s32 %s39, %s53
      %s338 = sor.u32 %s336, %s337
      %p339 = scmp.eq.s32.totalorder %s338, 0
      %s341 = sadd.s32 %s340, 1
      %s342 = scalar_select %p339, %s340, %s341
      %p345 = pneg %p339
      %p346 = scmp.eq.s32.totalorder %s31, 1
      %p347 = por %p345, %p346
      %p348 = scmp.ne.s32.totalorder %s340, %s343
      %p349 = scmp.eq.s32.totalorder %s31, 0
      %p350 = por %p348, %p349
      %p351 = scmp.ne.s32.totalorder %s340, %s343
      %p352 = scmp.eq.s32.totalorder %s36, 1
      %p353 = por %p351, %p352
      %p354 = scmp.ne.s32.totalorder %s343, %s344
      %p355 = scmp.eq.s32.totalorder %s36, 0
      %p356 = por %p354, %p355
      %p357 = scmp.ne.s32.totalorder %s343, %s344
      %p358 = scmp.eq.s32.totalorder %s37, 1
      %p359 = por %p357, %p358
      %p361 = scmp.ne.s32.totalorder %s344, %s360
      %p362 = scmp.eq.s32.totalorder %s37, 0
      %p363 = por %p361, %p362
      %p364 = scmp.le.s32.totalorder 1, %s31
      %p365 = scmp.lt.s32.totalorder %s31, 3
      %p366 = pnand %p364, %p365
      %p367 = pneg %p366
      // Predicated region
      $region9: #{tpu_custom_call.1} parent=5 // pred_check
        _
      $region10: #{tpu_custom_call.1} parent=5 // pred_check_branch
        %369 = sbr.rel (%p366) target = $region12
      $region11: #{tpu_custom_call.1} parent=5 // pred_region
        %s370 = ssub.s32 %s31, 1
        // Predicated region
        $region13: #{tpu_custom_call.1} parent=11 // pred_check
          %p371 = pneg %p104
        $region14: #{tpu_custom_call.1} parent=11 // pred_check_branch
          %373 = sbr.rel (%p371) target = $region16
        $region15: #{tpu_custom_call.1} parent=11 // pred_region
          %s375 = ssub.s32 64, 64
          %376 = vsyncadd [#allocation9], %s375
          %s377 = smul.addr %s41, 64
          %s378 = scalar_lea.hbm %s1, %s377
          %s380 = sshll.u32 [#allocation8], 4
          %s381 = int_to_ptr.vmem [resolvable:$true] %s380
          %383 = dma.hbm_to_vmem [thread:$0]  %s378, 64, %s381, [#allocation9]
        $region16: #{tpu_custom_call.1} parent=11 // pred_fallthru
          _
        // Predicated region
        $region17: #{tpu_custom_call.1} parent=11 // pred_check
          %p384 = pneg %p130
        $region18: #{tpu_custom_call.1} parent=11 // pred_check_branch
          %386 = sbr.rel (%p384) target = $region20
        $region19: #{tpu_custom_call.1} parent=11 // pred_region
          %s388 = ssub.s32 64, 64
          %389 = vsyncadd [#allocation9], %s388
          %s390 = smul.addr %s41, 64
          %s391 = scalar_lea.hbm %s2, %s390
          %s393 = sshll.u32 [#allocation10], 4
          %s394 = int_to_ptr.vmem [resolvable:$true] %s393
          %396 = dma.hbm_to_vmem [thread:$0]  %s391, 64, %s394, [#allocation9]
        $region20: #{tpu_custom_call.1} parent=11 // pred_fallthru
          _
        // Predicated region
        $region21: #{tpu_custom_call.1} parent=11 // pred_check
          %p397 = pneg %p151
        $region22: #{tpu_custom_call.1} parent=11 // pred_check_branch
          %399 = sbr.rel (%p397) target = $region24
        $region23: #{tpu_custom_call.1} parent=11 // pred_region
          %s401 = ssub.s32 256, 256
          %402 = vsyncadd [#allocation12], %s401
          %s403 = sshll.u32 [#allocation11], 4
          %s404 = int_to_ptr.vmem [resolvable:$true] %s403
          %409 = dma.hbm_to_vmem [thread:$0]  %s3, 256, %s404, [#allocation12], 64, 64, 4
        $region24: #{tpu_custom_call.1} parent=11 // pred_fallthru
          _
        // Predicated region
        $region25: #{tpu_custom_call.1} parent=11 // pred_check
          %p410 = pneg %p172
        $region26: #{tpu_custom_call.1} parent=11 // pred_check_branch
          %412 = sbr.rel (%p410) target = $region28
        $region27: #{tpu_custom_call.1} parent=11 // pred_region
          _
        $region28: #{tpu_custom_call.1} parent=11 // pred_fallthru
          _
        // Predicated region
        $region29: #{tpu_custom_call.1} parent=11 // pred_check
          %p413 = pneg %p193
        $region30: #{tpu_custom_call.1} parent=11 // pred_check_branch
          %415 = sbr.rel (%p413) target = $region32
        $region31: #{tpu_custom_call.1} parent=11 // pred_region
          _
        $region32: #{tpu_custom_call.1} parent=11 // pred_fallthru
          _
        // Predicated region
        $region33: #{tpu_custom_call.1} parent=11 // pred_check
          %p416 = pneg %p214
        $region34: #{tpu_custom_call.1} parent=11 // pred_check_branch
          %418 = sbr.rel (%p416) target = $region36
        $region35: #{tpu_custom_call.1} parent=11 // pred_region
          _
        $region36: #{tpu_custom_call.1} parent=11 // pred_fallthru
          _
        // Predicated region
        $region37: #{tpu_custom_call.1} parent=11 // pred_check
          %p419 = pneg %p235
        $region38: #{tpu_custom_call.1} parent=11 // pred_check_branch
          %421 = sbr.rel (%p419) target = $region40
        $region39: #{tpu_custom_call.1} parent=11 // pred_region
          %s423 = ssub.s32 256, 256
          %424 = vsyncadd [#allocation12], %s423
          %s425 = sshll.u32 [#allocation13], 4
          %s426 = int_to_ptr.vmem [resolvable:$true] %s425
          %431 = dma.hbm_to_vmem [thread:$0]  %s7, 256, %s426, [#allocation12], 64, 64, 4
        $region40: #{tpu_custom_call.1} parent=11 // pred_fallthru
          _
        // Predicated region
        $region41: #{tpu_custom_call.1} parent=11 // pred_check
          %p432 = pneg %p256
        $region42: #{tpu_custom_call.1} parent=11 // pred_check_branch
          %434 = sbr.rel (%p432) target = $region44
        $region43: #{tpu_custom_call.1} parent=11 // pred_region
          %s436 = ssub.s32 16, 16
          %437 = vsyncadd [#allocation15], %s436
          %s439 = sshll.u32 [#allocation14], 4
          %s440 = int_to_ptr.vmem [resolvable:$true] %s439
          %442 = dma.hbm_to_vmem [thread:$0]  %s8, 16, %s440, [#allocation15]
        $region44: #{tpu_custom_call.1} parent=11 // pred_fallthru
          _
        // Predicated region
        $region45: #{tpu_custom_call.1} parent=11 // pred_check
          %p443 = pneg %p277
        $region46: #{tpu_custom_call.1} parent=11 // pred_check_branch
          %445 = sbr.rel (%p443) target = $region48
        $region47: #{tpu_custom_call.1} parent=11 // pred_region
          _
        $region48: #{tpu_custom_call.1} parent=11 // pred_fallthru
          _
        // Predicated region
        $region49: #{tpu_custom_call.1} parent=11 // pred_check
          %p446 = pneg %p298
        $region50: #{tpu_custom_call.1} parent=11 // pred_check_branch
          %448 = sbr.rel (%p446) target = $region52
        $region51: #{tpu_custom_call.1} parent=11 // pred_region
          _
        $region52: #{tpu_custom_call.1} parent=11 // pred_fallthru
          _
      $region12: #{tpu_custom_call.1} parent=5 // pred_fallthru
        _
      %p449 = scmp.lt.s32.totalorder %s31, 2
      // Predicated region
      $region53: #{tpu_custom_call.1} parent=5 // pred_check
        %p450 = pneg %p449
      $region54: #{tpu_custom_call.1} parent=5 // pred_check_branch
        %452 = sbr.rel (%p450) target = $region56
      $region55: #{tpu_custom_call.1} parent=5 // pred_region
        // Predicated region
        $region57: #{tpu_custom_call.1} parent=55 // pred_check
          %p453 = pneg %p72
        $region58: #{tpu_custom_call.1} parent=55 // pred_check_branch
          %455 = sbr.rel (%p453) target = $region60
        $region59: #{tpu_custom_call.1} parent=55 // pred_region
          %s456 = sand.u32 %s62, 1
          %s457 = scalar_lea.sflag [#allocation6], %s456
          %s458 = sand.u32 %s62, 1
          %s459 = smul.addr %s458, 4
          %s460 = scalar_lea.vmem [#allocation5], %s459
          %s462 = ssub.s32 64, 64
          %463 = vsyncadd %s457, %s462
          %s464 = sadd.s32 %s39, %s38
          %s465 = smul.addr %s464, 64
          %s466 = scalar_lea.hbm %s0, %s465
          %s468 = sshll.u32 %s460, 4
          %s469 = int_to_ptr.vmem [resolvable:$true] %s468
          %471 = dma.hbm_to_vmem [thread:$0]  %s466, 64, %s469, %s457
        $region60: #{tpu_custom_call.1} parent=55 // pred_fallthru
          _
      $region56: #{tpu_custom_call.1} parent=5 // pred_fallthru
        _
      %p472 = scmp.le.s32.totalorder 1, %s31
      %p473 = scmp.lt.s32.totalorder %s31, 3
      %p474 = pnand %p472, %p473
      %p475 = pneg %p474
      // Predicated region
      $region61: #{tpu_custom_call.1} parent=5 // pred_check
        _
      $region62: #{tpu_custom_call.1} parent=5 // pred_check_branch
        %477 = sbr.rel (%p474) target = $region64
      $region63: #{tpu_custom_call.1} parent=5 // pred_region
        %s478 = ssub.s32 %s31, 1
        %s479 = sand.u32 %s65, 1
        %s480 = scalar_lea.sflag [#allocation6], %s479
        %s481 = sand.u32 %s65, 1
        %s482 = smul.addr %s481, 4
        %s483 = scalar_lea.vmem [#allocation5], %s482
        // Predicated region
        $region65: #{tpu_custom_call.1} parent=63 // pred_check
          %p484 = pneg %p78
        $region66: #{tpu_custom_call.1} parent=63 // pred_check_branch
          %486 = sbr.rel (%p484) target = $region68
        $region67: #{tpu_custom_call.1} parent=63 // pred_region
          %487 = dma.done %s480, 64
        $region68: #{tpu_custom_call.1} parent=63 // pred_fallthru
          _
        // Predicated region
        $region69: #{tpu_custom_call.1} parent=63 // pred_check
          %p488 = pneg %p104
        $region70: #{tpu_custom_call.1} parent=63 // pred_check_branch
          %490 = sbr.rel (%p488) target = $region72
        $region71: #{tpu_custom_call.1} parent=63 // pred_region
          %491 = dma.done [#allocation9], 64
        $region72: #{tpu_custom_call.1} parent=63 // pred_fallthru
          _
        // Predicated region
        $region73: #{tpu_custom_call.1} parent=63 // pred_check
          %p492 = pneg %p130
        $region74: #{tpu_custom_call.1} parent=63 // pred_check_branch
          %494 = sbr.rel (%p492) target = $region76
        $region75: #{tpu_custom_call.1} parent=63 // pred_region
          %495 = dma.done [#allocation9], 64
        $region76: #{tpu_custom_call.1} parent=63 // pred_fallthru
          _
        // Predicated region
        $region77: #{tpu_custom_call.1} parent=63 // pred_check
          %p496 = pneg %p151
        $region78: #{tpu_custom_call.1} parent=63 // pred_check_branch
          %498 = sbr.rel (%p496) target = $region80
        $region79: #{tpu_custom_call.1} parent=63 // pred_region
          %499 = dma.done [#allocation12], 256
        $region80: #{tpu_custom_call.1} parent=63 // pred_fallthru
          _
        // Predicated region
        $region81: #{tpu_custom_call.1} parent=63 // pred_check
          %p500 = pneg %p235
        $region82: #{tpu_custom_call.1} parent=63 // pred_check_branch
          %502 = sbr.rel (%p500) target = $region84
        $region83: #{tpu_custom_call.1} parent=63 // pred_region
          %503 = dma.done [#allocation12], 256
        $region84: #{tpu_custom_call.1} parent=63 // pred_fallthru
          _
        // Predicated region
        $region85: #{tpu_custom_call.1} parent=63 // pred_check
          %p504 = pneg %p256
        $region86: #{tpu_custom_call.1} parent=63 // pred_check_branch
          %506 = sbr.rel (%p504) target = $region88
        $region87: #{tpu_custom_call.1} parent=63 // pred_region
          %507 = dma.done [#allocation15], 16
        $region88: #{tpu_custom_call.1} parent=63 // pred_fallthru
          _
        %s508 = sand.u32 %s65, 1
        %s509 = scalar_lea.sflag [#allocation6], %s508
        %s510 = sand.u32 %s65, 1
        %s511 = smul.addr %s510, 4
        %s512 = scalar_lea.vmem [#allocation5], %s511
        %p513 = pneg %p78
        %p514 = pneg %p75
        %p515 = pneg %p104
        %p516 = pneg %p101
        %p517 = pneg %p130
        %p518 = pneg %p127
        %p519 = pneg %p151
        %p520 = pneg %p148
        %p521 = pneg %p172
        %p522 = pneg %p169
        %p523 = pneg %p193
        %p524 = pneg %p190
        %p525 = pneg %p214
        %p526 = pneg %p211
        %p527 = pneg %p235
        %p528 = pneg %p232
        %p529 = pneg %p256
        %p530 = pneg %p253
        %p531 = pneg %p277
        %p532 = pneg %p274
        %p533 = pneg %p298
        %p534 = pneg %p295
        %p535 = pneg %p326
        %p536 = pneg %p323
        %s537 = sand.u32 %s313, 1
        %s538 = scalar_lea.sflag [#allocation7], %s537
        %s539 = sand.u32 %s313, 1
        %s540 = smul.addr %s539, 8
        %s541 = scalar_lea.vmem [#allocation16], %s540
        %p542 = pneg %p356
        %p543 = pneg %p353
        %s544 = sand.u32 %s343, 1
        %s545 = scalar_lea.sflag [#allocation18], %s544
        %s546 = sand.u32 %s343, 1
        %s547 = smul.addr %s546, 32
        %s548 = scalar_lea.vmem [#allocation17], %s547
        %s549 = smul.u32 4, %s43
        %p551 = scmp.eq.s32.totalorder %s42, 0
        // Predicated region
        $region89: #{tpu_custom_call.1} parent=63 // pred_check
          %p552 = pneg %p551
        $region90: #{tpu_custom_call.1} parent=63 // pred_check_branch
          %554 = sbr.rel (%p552) target = $region92
        $region91: #{tpu_custom_call.1} parent=63 // pred_region
          %v555 = vld [vmem:[#allocation8] sm:$0xf]
          %v556 = vld [vmem:[#allocation10] sm:$0xf]
          %s557 = smul.u32 %s43, 4
          %s558 = smul.addr %s557, 4
          %s559 = scalar_lea.vmem %s5, %s558
          %v560 = vld [vmem:[%s559] sm:$0xf]
          %v561 = vld [vmem:[%s559 + $0x4] sm:$0xf]
          %v562 = vld [vmem:[%s559 + $0x8] sm:$0xf]
          %v563 = vld [vmem:[%s559 + $0xc] sm:$0xf]
          %s564 = scalar_lea.vmem %s6, %s43
          %v565 = vld [vmem:[%s564] sm:$0x1]
          %v567 = vlaneseq
          %v568 = vshrl.u32 %v567, 7
          %v569 = vsub.s32 0, %v568
          %v570 = vrot.slane %v565, %v569
          %v576 = vunpack.c.l.b16 %v560
          %v577 = vunpack.c.l.b16 %v561
          %v578 = vunpack.c.l.b16 %v562
          %v579 = vunpack.c.l.b16 %v563
          %v580 = vpack.c.b16 %v577, %v576
          %v581 = vpack.c.b16 %v579, %v578
          %vm584 = vcmask 261120
          %v586 = vsel %vm584, %v555, 0
          %588 = vmatprep.subr.bf16.mxu0 0
          %589 = vmatpush1.bf16.msra.mxu0 %v580
          %590 = vmatprep.subr.bf16.mxu0 0
          %591 = vmatpush1.bf16.msra.mxu0 %v581
          %592 = vmatprep.subr.bf16.mxu0 0
          %593 = vmatpush1.bf16.msra.mxu0 0
          %594 = vmatprep.subr.bf16.mxu0 0
          %595 = vmatpush1.bf16.msra.mxu0 0
          %596 = vmatprep.subr.bf16.mxu0 0
          %597 = vmatpush1.bf16.msra.mxu0 0
          %598 = vmatprep.subr.bf16.mxu0 0
          %599 = vmatpush1.bf16.msra.mxu0 0
          %600 = vmatprep.subr.bf16.mxu0 0
          %601 = vmatpush1.bf16.msra.mxu0 0
          %602 = vmatprep.subr.bf16.mxu0 0
          %603 = vmatpush1.bf16.msra.mxu0 0
          %604 = vmatprep.subr.bf16.mxu0 0
          %605 = vmatpush1.bf16.msra.mxu0 0
          %606 = vmatprep.subr.bf16.mxu0 0
          %607 = vmatpush1.bf16.msra.mxu0 0
          %608 = vmatprep.subr.bf16.mxu0 0
          %609 = vmatpush1.bf16.msra.mxu0 0
          %610 = vmatprep.subr.bf16.mxu0 0
          %611 = vmatpush1.bf16.msra.mxu0 0
          %612 = vmatprep.subr.bf16.mxu0 0
          %613 = vmatpush1.bf16.msra.mxu0 0
          %614 = vmatprep.subr.bf16.mxu0 0
          %615 = vmatpush1.bf16.msra.mxu0 0
          %616 = vmatprep.subr.bf16.mxu0 0
          %617 = vmatpush1.bf16.msra.mxu0 0
          %618 = vmatprep.subr.bf16.mxu0 0
          %619 = vmatpush1.bf16.msra.mxu0 0
          %620 = vmatprep.mubr.bf16.mxu0 0
          %621 = vmatmul.mubr.bf16.gmra.mrb[0].mxu0 %v586
          %v622 = vpop.f32.mrb[0].mxu0
          %v623 = vadd.f32 %v570, %v622
          %v624 = vpop.f32.mrb[0].mxu0
          %v625 = vpop.f32.mrb[0].mxu0
          %v626 = vpop.f32.mrb[0].mxu0
          %627 = vdwg.mxu0
          %s628 = smul.addr %s557, 4
          %s629 = scalar_lea.vmem [#allocation13], %s628
          %v630 = vld [vmem:[%s629] sm:$0xf]
          %v631 = vld [vmem:[%s629 + $0x4] sm:$0xf]
          %v632 = vld [vmem:[%s629 + $0x8] sm:$0xf]
          %v633 = vld [vmem:[%s629 + $0xc] sm:$0xf]
          %s634 = scalar_lea.vmem [#allocation14], %s43
          %v635 = vld [vmem:[%s634] sm:$0x1]
          %v637 = vlaneseq
          %v638 = vshrl.u32 %v637, 7
          %v639 = vsub.s32 0, %v638
          %v640 = vrot.slane %v635, %v639
          %v646 = vunpack.c.l.b16 %v630
          %v647 = vunpack.c.l.b16 %v631
          %v648 = vunpack.c.l.b16 %v632
          %v649 = vunpack.c.l.b16 %v633
          %v650 = vpack.c.b16 %v647, %v646
          %v651 = vpack.c.b16 %v649, %v648
          %v655 = vsel %vm584, %v556, 0
          %657 = vmatprep.subr.bf16.mxu0 0
          %658 = vmatpush1.bf16.msra.mxu0 %v650
          %659 = vmatprep.subr.bf16.mxu0 0
          %660 = vmatpush1.bf16.msra.mxu0 %v651
          %661 = vmatprep.subr.bf16.mxu0 0
          %662 = vmatpush1.bf16.msra.mxu0 0
          %663 = vmatprep.subr.bf16.mxu0 0
          %664 = vmatpush1.bf16.msra.mxu0 0
          %665 = vmatprep.subr.bf16.mxu0 0
          %666 = vmatpush1.bf16.msra.mxu0 0
          %667 = vmatprep.subr.bf16.mxu0 0
          %668 = vmatpush1.bf16.msra.mxu0 0
          %669 = vmatprep.subr.bf16.mxu0 0
          %670 = vmatpush1.bf16.msra.mxu0 0
          %671 = vmatprep.subr.bf16.mxu0 0
          %672 = vmatpush1.bf16.msra.mxu0 0
          %673 = vmatprep.subr.bf16.mxu0 0
          %674 = vmatpush1.bf16.msra.mxu0 0
          %675 = vmatprep.subr.bf16.mxu0 0
          %676 = vmatpush1.bf16.msra.mxu0 0
          %677 = vmatprep.subr.bf16.mxu0 0
          %678 = vmatpush1.bf16.msra.mxu0 0
          %679 = vmatprep.subr.bf16.mxu0 0
          %680 = vmatpush1.bf16.msra.mxu0 0
          %681 = vmatprep.subr.bf16.mxu0 0
          %682 = vmatpush1.bf16.msra.mxu0 0
          %683 = vmatprep.subr.bf16.mxu0 0
          %684 = vmatpush1.bf16.msra.mxu0 0
          %685 = vmatprep.subr.bf16.mxu0 0
          %686 = vmatpush1.bf16.msra.mxu0 0
          %687 = vmatprep.subr.bf16.mxu0 0
          %688 = vmatpush1.bf16.msra.mxu0 0
          %689 = vmatprep.mubr.bf16.mxu0 0
          %690 = vmatmul.mubr.bf16.gmra.mrb[0].mxu0 %v655
          %v691 = vpop.f32.mrb[0].mxu0
          %v692 = vadd.f32 %v640, %v691
          %v693 = vpop.f32.mrb[0].mxu0
          %v694 = vpop.f32.mrb[0].mxu0
          %v695 = vpop.f32.mrb[0].mxu0
          %696 = vdwg.mxu0
          %v697 = vpack.c.bf16 %v623, %v623
          %s698 = smul.addr %s43, 4
          %s699 = scalar_lea.vmem [#allocation2], %s698
          %vm700 = vcmask 257024
          %701 = vst.msk [vmem:[%s699] sm:$0xf] %vm700, %v697
          %v702 = vpack.c.bf16 %v692, %v692
          %s703 = smul.addr %s43, 4
          %s704 = scalar_lea.vmem [#allocation3], %s703
          %705 = vst.msk [vmem:[%s704] sm:$0xf] %vm700, %v702
        $region92: #{tpu_custom_call.1} parent=63 // pred_fallthru
          _
        %v706 = vld [vmem:[%s483] sm:$0xf]
        %s707 = smul.u32 %s43, 4
        %s708 = smul.addr %s707, 4
        %s709 = scalar_lea.vmem [#allocation11], %s708
        %v710 = vld [vmem:[%s709] sm:$0xf]
        %v711 = vld [vmem:[%s709 + $0x4] sm:$0xf]
        %v712 = vld [vmem:[%s709 + $0x8] sm:$0xf]
        %v713 = vld [vmem:[%s709 + $0xc] sm:$0xf]
        %s714 = scalar_lea.vmem %s4, %s43
        %v715 = vld [vmem:[%s714] sm:$0x1]
        %v717 = vlaneseq
        %v718 = vshrl.u32 %v717, 7
        %v719 = vsub.s32 0, %v718
        %v720 = vrot.slane %v715, %v719
        %v726 = vunpack.c.l.b16 %v710
        %v727 = vunpack.c.l.b16 %v711
        %v728 = vunpack.c.l.b16 %v712
        %v729 = vunpack.c.l.b16 %v713
        %v730 = vpack.c.b16 %v727, %v726
        %v731 = vpack.c.b16 %v729, %v728
        %vm734 = vcmask 261120
        %v736 = vsel %vm734, %v706, 0
        %738 = vmatprep.subr.bf16.mxu0 0
        %739 = vmatpush1.bf16.msra.mxu0 %v730
        %740 = vmatprep.subr.bf16.mxu0 0
        %741 = vmatpush1.bf16.msra.mxu0 %v731
        %742 = vmatprep.subr.bf16.mxu0 0
        %743 = vmatpush1.bf16.msra.mxu0 0
        %744 = vmatprep.subr.bf16.mxu0 0
        %745 = vmatpush1.bf16.msra.mxu0 0
        %746 = vmatprep.subr.bf16.mxu0 0
        %747 = vmatpush1.bf16.msra.mxu0 0
        %748 = vmatprep.subr.bf16.mxu0 0
        %749 = vmatpush1.bf16.msra.mxu0 0
        %750 = vmatprep.subr.bf16.mxu0 0
        %751 = vmatpush1.bf16.msra.mxu0 0
        %752 = vmatprep.subr.bf16.mxu0 0
        %753 = vmatpush1.bf16.msra.mxu0 0
        %754 = vmatprep.subr.bf16.mxu0 0
        %755 = vmatpush1.bf16.msra.mxu0 0
        %756 = vmatprep.subr.bf16.mxu0 0
        %757 = vmatpush1.bf16.msra.mxu0 0
        %758 = vmatprep.subr.bf16.mxu0 0
        %759 = vmatpush1.bf16.msra.mxu0 0
        %760 = vmatprep.subr.bf16.mxu0 0
        %761 = vmatpush1.bf16.msra.mxu0 0
        %762 = vmatprep.subr.bf16.mxu0 0
        %763 = vmatpush1.bf16.msra.mxu0 0
        %764 = vmatprep.subr.bf16.mxu0 0
        %765 = vmatpush1.bf16.msra.mxu0 0
        %766 = vmatprep.subr.bf16.mxu0 0
        %767 = vmatpush1.bf16.msra.mxu0 0
        %768 = vmatprep.subr.bf16.mxu0 0
        %769 = vmatpush1.bf16.msra.mxu0 0
        %770 = vmatprep.mubr.bf16.mxu0 0
        %771 = vmatmul.mubr.bf16.gmra.mrb[0].mxu0 %v736
        %v772 = vpop.f32.mrb[0].mxu0
        %v773 = vadd.f32 %v720, %v772
        %v774 = vpop.f32.mrb[0].mxu0
        %v775 = vpop.f32.mrb[0].mxu0
        %v776 = vpop.f32.mrb[0].mxu0
        %777 = vdwg.mxu0
        %v778 = vpack.c.bf16 %v773, %v773
        %s779 = smul.addr %s43, 4
        %s780 = scalar_lea.vmem [#allocation2], %s779
        %v781 = vld [vmem:[%s780] sm:$0xf]
        %s782 = smul.addr %s43, 4
        %s783 = scalar_lea.vmem [#allocation3], %s782
        %v784 = vld [vmem:[%s783] sm:$0xf]
        %vm785 = vcmask 64512
        %v787 = vsel %vm785, %v778, 0
        %v790 = vsel %vm785, %v781, 0
        %792 = vmatprep.subr.bf16.mxu0 0
        %793 = vmatpush1.bf16.xpose.msra.mxu0 %v790
        %794 = vmatprep.subr.bf16.mxu0 0
        %795 = vmatpush1.bf16.xpose.msra.mxu0 0
        %796 = vmatprep.subr.bf16.mxu0 0
        %797 = vmatpush1.bf16.xpose.msra.mxu0 0
        %798 = vmatprep.subr.bf16.mxu0 0
        %799 = vmatpush1.bf16.xpose.msra.mxu0 0
        %800 = vmatprep.subr.bf16.mxu0 0
        %801 = vmatpush1.bf16.xpose.msra.mxu0 0
        %802 = vmatprep.subr.bf16.mxu0 0
        %803 = vmatpush1.bf16.xpose.msra.mxu0 0
        %804 = vmatprep.subr.bf16.mxu0 0
        %805 = vmatpush1.bf16.xpose.msra.mxu0 0
        %806 = vmatprep.subr.bf16.mxu0 0
        %807 = vmatpush1.bf16.xpose.msra.mxu0 0
        %808 = vmatprep.subr.bf16.mxu0 0
        %809 = vmatpush1.bf16.xpose.msra.mxu0 0
        %810 = vmatprep.subr.bf16.mxu0 0
        %811 = vmatpush1.bf16.xpose.msra.mxu0 0
        %812 = vmatprep.subr.bf16.mxu0 0
        %813 = vmatpush1.bf16.xpose.msra.mxu0 0
        %814 = vmatprep.subr.bf16.mxu0 0
        %815 = vmatpush1.bf16.xpose.msra.mxu0 0
        %816 = vmatprep.subr.bf16.mxu0 0
        %817 = vmatpush1.bf16.xpose.msra.mxu0 0
        %818 = vmatprep.subr.bf16.mxu0 0
        %819 = vmatpush1.bf16.xpose.msra.mxu0 0
        %820 = vmatprep.subr.bf16.mxu0 0
        %821 = vmatpush1.bf16.xpose.msra.mxu0 0
        %822 = vmatprep.subr.bf16.mxu0 0
        %823 = vmatpush1.bf16.xpose.msra.mxu0 0
        %824 = vmatprep.mubr.bf16.mxu0 0
        %825 = vmatmul.mubr.bf16.gmra.mrb[0].mxu0 %v787
        %v826 = vpop.f32.mrb[0].mxu0
        %v827 = vadd.f32 0.0, %v826
        %v828 = vpop.f32.mrb[0].mxu0
        %v829 = vpop.f32.mrb[0].mxu0
        %v830 = vpop.f32.mrb[0].mxu0
        %831 = vdwg.mxu0
        %v832 = vsel %vm785, %v827, -inf
        %833 = vmax.xlane.f32.xlu0 %v832
        %v834 = vpop.xlane.xlu0 %833
        %v835 = vsub.f32 %v827, %v834
        %v836 = vmul.f32 %v835, 1.442695
        %v837 = vpow.pop %v836
        %v838 = vsel %vm785, %v837, 0.0
        %839 = vadd.xlane.f32.xlu0 %v838
        %v840 = vpop.xlane.xlu0 %839
        %v841 = vrcp.pop %v840
        %v842 = vmul.f32 %v837, %v841
        %843 = vst.msk [vmem:[%s548] sm:$0xff] %vm785, %v842
        %v844 = vpack.c.bf16 %v842, %v842
        %v846 = vsel %vm785, %v844, 0
        %vm848 = vcmask 1043456
        %v850 = vsel %vm848, %v784, 0
        %852 = vmatprep.subr.bf16.mxu0 0
        %853 = vmatpush1.bf16.msra.mxu0 %v850
        %854 = vmatprep.subr.bf16.mxu0 0
        %855 = vmatpush1.bf16.msra.mxu0 0
        %856 = vmatprep.subr.bf16.mxu0 0
        %857 = vmatpush1.bf16.msra.mxu0 0
        %858 = vmatprep.subr.bf16.mxu0 0
        %859 = vmatpush1.bf16.msra.mxu0 0
        %860 = vmatprep.subr.bf16.mxu0 0
        %861 = vmatpush1.bf16.msra.mxu0 0
        %862 = vmatprep.subr.bf16.mxu0 0
        %863 = vmatpush1.bf16.msra.mxu0 0
        %864 = vmatprep.subr.bf16.mxu0 0
        %865 = vmatpush1.bf16.msra.mxu0 0
        %866 = vmatprep.subr.bf16.mxu0 0
        %867 = vmatpush1.bf16.msra.mxu0 0
        %868 = vmatprep.subr.bf16.mxu0 0
        %869 = vmatpush1.bf16.msra.mxu0 0
        %870 = vmatprep.subr.bf16.mxu0 0
        %871 = vmatpush1.bf16.msra.mxu0 0
        %872 = vmatprep.subr.bf16.mxu0 0
        %873 = vmatpush1.bf16.msra.mxu0 0
        %874 = vmatprep.subr.bf16.mxu0 0
        %875 = vmatpush1.bf16.msra.mxu0 0
        %876 = vmatprep.subr.bf16.mxu0 0
        %877 = vmatpush1.bf16.msra.mxu0 0
        %878 = vmatprep.subr.bf16.mxu0 0
        %879 = vmatpush1.bf16.msra.mxu0 0
        %880 = vmatprep.subr.bf16.mxu0 0
        %881 = vmatpush1.bf16.msra.mxu0 0
        %882 = vmatprep.subr.bf16.mxu0 0
        %883 = vmatpush1.bf16.msra.mxu0 0
        %884 = vmatprep.mubr.bf16.mxu0 0
        %885 = vmatmul.mubr.bf16.gmra.mrb[0].mxu0 %v846
        %v886 = vpop.f32.mrb[0].mxu0
        %v887 = vadd.f32 0.0, %v886
        %v888 = vpop.f32.mrb[0].mxu0
        %v889 = vpop.f32.mrb[0].mxu0
        %v890 = vpop.f32.mrb[0].mxu0
        %891 = vdwg.mxu0
        %893 = vrot.lane.b32.xlu0 %v778, 120
        %v894 = vpop.permute.xlu0 %893
        %v896 = vunpack.c.l.b16 %v781
        %v897 = vpack.c.b16 %v896, %v896
        %898 = vrot.lane.b32.xlu0 %v897, 120
        %v899 = vpop.permute.xlu0 %898
        %v901 = vsel %vm785, %v894, 0
        %v904 = vsel %vm785, %v899, 0
        %906 = vmatprep.subr.bf16.mxu0 0
        %907 = vmatpush1.bf16.xpose.msra.mxu0 %v904
        %908 = vmatprep.subr.bf16.mxu0 0
        %909 = vmatpush1.bf16.xpose.msra.mxu0 0
        %910 = vmatprep.subr.bf16.mxu0 0
        %911 = vmatpush1.bf16.xpose.msra.mxu0 0
        %912 = vmatprep.subr.bf16.mxu0 0
        %913 = vmatpush1.bf16.xpose.msra.mxu0 0
        %914 = vmatprep.subr.bf16.mxu0 0
        %915 = vmatpush1.bf16.xpose.msra.mxu0 0
        %916 = vmatprep.subr.bf16.mxu0 0
        %917 = vmatpush1.bf16.xpose.msra.mxu0 0
        %918 = vmatprep.subr.bf16.mxu0 0
        %919 = vmatpush1.bf16.xpose.msra.mxu0 0
        %920 = vmatprep.subr.bf16.mxu0 0
        %921 = vmatpush1.bf16.xpose.msra.mxu0 0
        %922 = vmatprep.subr.bf16.mxu0 0
        %923 = vmatpush1.bf16.xpose.msra.mxu0 0
        %924 = vmatprep.subr.bf16.mxu0 0
        %925 = vmatpush1.bf16.xpose.msra.mxu0 0
        %926 = vmatprep.subr.bf16.mxu0 0
        %927 = vmatpush1.bf16.xpose.msra.mxu0 0
        %928 = vmatprep.subr.bf16.mxu0 0
        %929 = vmatpush1.bf16.xpose.msra.mxu0 0
        %930 = vmatprep.subr.bf16.mxu0 0
        %931 = vmatpush1.bf16.xpose.msra.mxu0 0
        %932 = vmatprep.subr.bf16.mxu0 0
        %933 = vmatpush1.bf16.xpose.msra.mxu0 0
        %934 = vmatprep.subr.bf16.mxu0 0
        %935 = vmatpush1.bf16.xpose.msra.mxu0 0
        %936 = vmatprep.subr.bf16.mxu0 0
        %937 = vmatpush1.bf16.xpose.msra.mxu0 0
        %938 = vmatprep.mubr.bf16.mxu0 0
        %939 = vmatmul.mubr.bf16.gmra.mrb[0].mxu0 %v901
        %v940 = vpop.f32.mrb[0].mxu0
        %v941 = vadd.f32 0.0, %v940
        %v942 = vpop.f32.mrb[0].mxu0
        %v943 = vpop.f32.mrb[0].mxu0
        %v944 = vpop.f32.mrb[0].mxu0
        %945 = vdwg.mxu0
        %v946 = vsel %vm785, %v941, -inf
        %947 = vmax.xlane.f32.xlu0 %v946
        %v948 = vpop.xlane.xlu0 %947
        %v949 = vsub.f32 %v941, %v948
        %v950 = vmul.f32 %v949, 1.442695
        %v951 = vpow.pop %v950
        %v952 = vsel %vm785, %v951, 0.0
        %953 = vadd.xlane.f32.xlu0 %v952
        %v954 = vpop.xlane.xlu0 %953
        %v955 = vrcp.pop %v954
        %v956 = vmul.f32 %v951, %v955
        %s957 = scalar_lea.vmem %s548, 8 [#allocation17]
        %958 = vst.msk [vmem:[%s957] sm:$0xff] %vm785, %v956
        %v959 = vpack.c.bf16 %v956, %v956
        %v961 = vunpack.c.l.b16 %v784
        %v962 = vpack.c.b16 %v961, %v961
        %963 = vrot.lane.b32.xlu0 %v962, 120
        %v964 = vpop.permute.xlu0 %963
        %v966 = vsel %vm785, %v959, 0
        %v969 = vsel %vm848, %v964, 0
        %971 = vmatprep.subr.bf16.mxu0 0
        %972 = vmatpush1.bf16.msra.mxu0 %v969
        %973 = vmatprep.subr.bf16.mxu0 0
        %974 = vmatpush1.bf16.msra.mxu0 0
        %975 = vmatprep.subr.bf16.mxu0 0
        %976 = vmatpush1.bf16.msra.mxu0 0
        %977 = vmatprep.subr.bf16.mxu0 0
        %978 = vmatpush1.bf16.msra.mxu0 0
        %979 = vmatprep.subr.bf16.mxu0 0
        %980 = vmatpush1.bf16.msra.mxu0 0
        %981 = vmatprep.subr.bf16.mxu0 0
        %982 = vmatpush1.bf16.msra.mxu0 0
        %983 = vmatprep.subr.bf16.mxu0 0
        %984 = vmatpush1.bf16.msra.mxu0 0
        %985 = vmatprep.subr.bf16.mxu0 0
        %986 = vmatpush1.bf16.msra.mxu0 0
        %987 = vmatprep.subr.bf16.mxu0 0
        %988 = vmatpush1.bf16.msra.mxu0 0
        %989 = vmatprep.subr.bf16.mxu0 0
        %990 = vmatpush1.bf16.msra.mxu0 0
        %991 = vmatprep.subr.bf16.mxu0 0
        %992 = vmatpush1.bf16.msra.mxu0 0
        %993 = vmatprep.subr.bf16.mxu0 0
        %994 = vmatpush1.bf16.msra.mxu0 0
        %995 = vmatprep.subr.bf16.mxu0 0
        %996 = vmatpush1.bf16.msra.mxu0 0
        %997 = vmatprep.subr.bf16.mxu0 0
        %998 = vmatpush1.bf16.msra.mxu0 0
        %999 = vmatprep.subr.bf16.mxu0 0
        %1000 = vmatpush1.bf16.msra.mxu0 0
        %1001 = vmatprep.subr.bf16.mxu0 0
        %1002 = vmatpush1.bf16.msra.mxu0 0
        %1003 = vmatprep.mubr.bf16.mxu0 0
        %1004 = vmatmul.mubr.bf16.gmra.mrb[0].mxu0 %v966
        %v1005 = vpop.f32.mrb[0].mxu0
        %v1006 = vadd.f32 0.0, %v1005
        %v1007 = vpop.f32.mrb[0].mxu0
        %v1008 = vpop.f32.mrb[0].mxu0
        %v1009 = vpop.f32.mrb[0].mxu0
        %1010 = vdwg.mxu0
        %1011 = vrot.lane.b32.xlu0 %v778, 112
        %v1012 = vpop.permute.xlu0 %1011
        %1013 = vrot.lane.b32.xlu0 %v897, 112
        %v1014 = vpop.permute.xlu0 %1013
        %v1016 = vsel %vm785, %v1012, 0
        %v1019 = vsel %vm785, %v1014, 0
        %1021 = vmatprep.subr.bf16.mxu0 0
        %1022 = vmatpush1.bf16.xpose.msra.mxu0 %v1019
        %1023 = vmatprep.subr.bf16.mxu0 0
        %1024 = vmatpush1.bf16.xpose.msra.mxu0 0
        %1025 = vmatprep.subr.bf16.mxu0 0
        %1026 = vmatpush1.bf16.xpose.msra.mxu0 0
        %1027 = vmatprep.subr.bf16.mxu0 0
        %1028 = vmatpush1.bf16.xpose.msra.mxu0 0
        %1029 = vmatprep.subr.bf16.mxu0 0
        %1030 = vmatpush1.bf16.xpose.msra.mxu0 0
        %1031 = vmatprep.subr.bf16.mxu0 0
        %1032 = vmatpush1.bf16.xpose.msra.mxu0 0
        %1033 = vmatprep.subr.bf16.mxu0 0
        %1034 = vmatpush1.bf16.xpose.msra.mxu0 0
        %1035 = vmatprep.subr.bf16.mxu0 0
        %1036 = vmatpush1.bf16.xpose.msra.mxu0 0
        %1037 = vmatprep.subr.bf16.mxu0 0
        %1038 = vmatpush1.bf16.xpose.msra.mxu0 0
        %1039 = vmatprep.subr.bf16.mxu0 0
        %1040 = vmatpush1.bf16.xpose.msra.mxu0 0
        %1041 = vmatprep.subr.bf16.mxu0 0
        %1042 = vmatpush1.bf16.xpose.msra.mxu0 0
        %1043 = vmatprep.subr.bf16.mxu0 0
        %1044 = vmatpush1.bf16.xpose.msra.mxu0 0
        %1045 = vmatprep.subr.bf16.mxu0 0
        %1046 = vmatpush1.bf16.xpose.msra.mxu0 0
        %1047 = vmatprep.subr.bf16.mxu0 0
        %1048 = vmatpush1.bf16.xpose.msra.mxu0 0
        %1049 = vmatprep.subr.bf16.mxu0 0
        %1050 = vmatpush1.bf16.xpose.msra.mxu0 0
        %1051 = vmatprep.subr.bf16.mxu0 0
        %1052 = vmatpush1.bf16.xpose.msra.mxu0 0
        %1053 = vmatprep.mubr.bf16.mxu0 0
        %1054 = vmatmul.mubr.bf16.gmra.mrb[0].mxu0 %v1016
        %v1055 = vpop.f32.mrb[0].mxu0
        %v1056 = vadd.f32 0.0, %v1055
        %v1057 = vpop.f32.mrb[0].mxu0
        %v1058 = vpop.f32.mrb[0].mxu0
        %v1059 = vpop.f32.mrb[0].mxu0
        %1060 = vdwg.mxu0
        %v1061 = vsel %vm785, %v1056, -inf
        %1062 = vmax.xlane.f32.xlu0 %v1061
        %v1063 = vpop.xlane.xlu0 %1062
        %v1064 = vsub.f32 %v1056, %v1063
        %v1065 = vmul.f32 %v1064, 1.442695
        %v1066 = vpow.pop %v1065
        %v1067 = vsel %vm785, %v1066, 0.0
        %1068 = vadd.xlane.f32.xlu0 %v1067
        %v1069 = vpop.xlane.xlu0 %1068
        %v1070 = vrcp.pop %v1069
        %v1071 = vmul.f32 %v1066, %v1070
        %s1072 = scalar_lea.vmem %s548, 16 [#allocation17]
        %1073 = vst.msk [vmem:[%s1072] sm:$0xff] %vm785, %v1071
        %v1074 = vpack.c.bf16 %v1071, %v1071
        %1075 = vrot.lane.b32.xlu0 %v962, 112
        %v1076 = vpop.permute.xlu0 %1075
        %v1078 = vsel %vm785, %v1074, 0
        %v1081 = vsel %vm848, %v1076, 0
        %1083 = vmatprep.subr.bf16.mxu0 0
        %1084 = vmatpush1.bf16.msra.mxu0 %v1081
        %1085 = vmatprep.subr.bf16.mxu0 0
        %1086 = vmatpush1.bf16.msra.mxu0 0
        %1087 = vmatprep.subr.bf16.mxu0 0
        %1088 = vmatpush1.bf16.msra.mxu0 0
        %1089 = vmatprep.subr.bf16.mxu0 0
        %1090 = vmatpush1.bf16.msra.mxu0 0
        %1091 = vmatprep.subr.bf16.mxu0 0
        %1092 = vmatpush1.bf16.msra.mxu0 0
        %1093 = vmatprep.subr.bf16.mxu0 0
        %1094 = vmatpush1.bf16.msra.mxu0 0
        %1095 = vmatprep.subr.bf16.mxu0 0
        %1096 = vmatpush1.bf16.msra.mxu0 0
        %1097 = vmatprep.subr.bf16.mxu0 0
        %1098 = vmatpush1.bf16.msra.mxu0 0
        %1099 = vmatprep.subr.bf16.mxu0 0
        %1100 = vmatpush1.bf16.msra.mxu0 0
        %1101 = vmatprep.subr.bf16.mxu0 0
        %1102 = vmatpush1.bf16.msra.mxu0 0
        %1103 = vmatprep.subr.bf16.mxu0 0
        %1104 = vmatpush1.bf16.msra.mxu0 0
        %1105 = vmatprep.subr.bf16.mxu0 0
        %1106 = vmatpush1.bf16.msra.mxu0 0
        %1107 = vmatprep.subr.bf16.mxu0 0
        %1108 = vmatpush1.bf16.msra.mxu0 0
        %1109 = vmatprep.subr.bf16.mxu0 0
        %1110 = vmatpush1.bf16.msra.mxu0 0
        %1111 = vmatprep.subr.bf16.mxu0 0
        %1112 = vmatpush1.bf16.msra.mxu0 0
        %1113 = vmatprep.subr.bf16.mxu0 0
        %1114 = vmatpush1.bf16.msra.mxu0 0
        %1115 = vmatprep.mubr.bf16.mxu0 0
        %1116 = vmatmul.mubr.bf16.gmra.mrb[0].mxu0 %v1078
        %v1117 = vpop.f32.mrb[0].mxu0
        %v1118 = vadd.f32 0.0, %v1117
        %v1119 = vpop.f32.mrb[0].mxu0
        %v1120 = vpop.f32.mrb[0].mxu0
        %v1121 = vpop.f32.mrb[0].mxu0
        %1122 = vdwg.mxu0
        %1123 = vrot.lane.b32.xlu0 %v778, 104
        %v1124 = vpop.permute.xlu0 %1123
        %1125 = vrot.lane.b32.xlu0 %v897, 104
        %v1126 = vpop.permute.xlu0 %1125
        %v1128 = vsel %vm785, %v1124, 0
        %v1131 = vsel %vm785, %v1126, 0
        %1133 = vmatprep.subr.bf16.mxu0 0
        %1134 = vmatpush1.bf16.xpose.msra.mxu0 %v1131
        %1135 = vmatprep.subr.bf16.mxu0 0
        %1136 = vmatpush1.bf16.xpose.msra.mxu0 0
        %1137 = vmatprep.subr.bf16.mxu0 0
        %1138 = vmatpush1.bf16.xpose.msra.mxu0 0
        %1139 = vmatprep.subr.bf16.mxu0 0
        %1140 = vmatpush1.bf16.xpose.msra.mxu0 0
        %1141 = vmatprep.subr.bf16.mxu0 0
        %1142 = vmatpush1.bf16.xpose.msra.mxu0 0
        %1143 = vmatprep.subr.bf16.mxu0 0
        %1144 = vmatpush1.bf16.xpose.msra.mxu0 0
        %1145 = vmatprep.subr.bf16.mxu0 0
        %1146 = vmatpush1.bf16.xpose.msra.mxu0 0
        %1147 = vmatprep.subr.bf16.mxu0 0
        %1148 = vmatpush1.bf16.xpose.msra.mxu0 0
        %1149 = vmatprep.subr.bf16.mxu0 0
        %1150 = vmatpush1.bf16.xpose.msra.mxu0 0
        %1151 = vmatprep.subr.bf16.mxu0 0
        %1152 = vmatpush1.bf16.xpose.msra.mxu0 0
        %1153 = vmatprep.subr.bf16.mxu0 0
        %1154 = vmatpush1.bf16.xpose.msra.mxu0 0
        %1155 = vmatprep.subr.bf16.mxu0 0
        %1156 = vmatpush1.bf16.xpose.msra.mxu0 0
        %1157 = vmatprep.subr.bf16.mxu0 0
        %1158 = vmatpush1.bf16.xpose.msra.mxu0 0
        %1159 = vmatprep.subr.bf16.mxu0 0
        %1160 = vmatpush1.bf16.xpose.msra.mxu0 0
        %1161 = vmatprep.subr.bf16.mxu0 0
        %1162 = vmatpush1.bf16.xpose.msra.mxu0 0
        %1163 = vmatprep.subr.bf16.mxu0 0
        %1164 = vmatpush1.bf16.xpose.msra.mxu0 0
        %1165 = vmatprep.mubr.bf16.mxu0 0
        %1166 = vmatmul.mubr.bf16.gmra.mrb[0].mxu0 %v1128
        %v1167 = vpop.f32.mrb[0].mxu0
        %v1168 = vadd.f32 0.0, %v1167
        %v1169 = vpop.f32.mrb[0].mxu0
        %v1170 = vpop.f32.mrb[0].mxu0
        %v1171 = vpop.f32.mrb[0].mxu0
        %1172 = vdwg.mxu0
        %v1173 = vsel %vm785, %v1168, -inf
        %1174 = vmax.xlane.f32.xlu0 %v1173
        %v1175 = vpop.xlane.xlu0 %1174
        %v1176 = vsub.f32 %v1168, %v1175
        %v1177 = vmul.f32 %v1176, 1.442695
        %v1178 = vpow.pop %v1177
        %v1179 = vsel %vm785, %v1178, 0.0
        %1180 = vadd.xlane.f32.xlu0 %v1179
        %v1181 = vpop.xlane.xlu0 %1180
        %v1182 = vrcp.pop %v1181
        %v1183 = vmul.f32 %v1178, %v1182
        %s1184 = scalar_lea.vmem %s548, 24 [#allocation17]
        %1185 = vst.msk [vmem:[%s1184] sm:$0xff] %vm785, %v1183
        %v1186 = vpack.c.bf16 %v1183, %v1183
        %1187 = vrot.lane.b32.xlu0 %v962, 104
        %v1188 = vpop.permute.xlu0 %1187
        %v1190 = vsel %vm785, %v1186, 0
        %v1193 = vsel %vm848, %v1188, 0
        %1195 = vmatprep.subr.bf16.mxu0 0
        %1196 = vmatpush1.bf16.msra.mxu0 %v1193
        %1197 = vmatprep.subr.bf16.mxu0 0
        %1198 = vmatpush1.bf16.msra.mxu0 0
        %1199 = vmatprep.subr.bf16.mxu0 0
        %1200 = vmatpush1.bf16.msra.mxu0 0
        %1201 = vmatprep.subr.bf16.mxu0 0
        %1202 = vmatpush1.bf16.msra.mxu0 0
        %1203 = vmatprep.subr.bf16.mxu0 0
        %1204 = vmatpush1.bf16.msra.mxu0 0
        %1205 = vmatprep.subr.bf16.mxu0 0
        %1206 = vmatpush1.bf16.msra.mxu0 0
        %1207 = vmatprep.subr.bf16.mxu0 0
        %1208 = vmatpush1.bf16.msra.mxu0 0
        %1209 = vmatprep.subr.bf16.mxu0 0
        %1210 = vmatpush1.bf16.msra.mxu0 0
        %1211 = vmatprep.subr.bf16.mxu0 0
        %1212 = vmatpush1.bf16.msra.mxu0 0
        %1213 = vmatprep.subr.bf16.mxu0 0
        %1214 = vmatpush1.bf16.msra.mxu0 0
        %1215 = vmatprep.subr.bf16.mxu0 0
        %1216 = vmatpush1.bf16.msra.mxu0 0
        %1217 = vmatprep.subr.bf16.mxu0 0
        %1218 = vmatpush1.bf16.msra.mxu0 0
        %1219 = vmatprep.subr.bf16.mxu0 0
        %1220 = vmatpush1.bf16.msra.mxu0 0
        %1221 = vmatprep.subr.bf16.mxu0 0
        %1222 = vmatpush1.bf16.msra.mxu0 0
        %1223 = vmatprep.subr.bf16.mxu0 0
        %1224 = vmatpush1.bf16.msra.mxu0 0
        %1225 = vmatprep.subr.bf16.mxu0 0
        %1226 = vmatpush1.bf16.msra.mxu0 0
        %1227 = vmatprep.mubr.bf16.mxu0 0
        %1228 = vmatmul.mubr.bf16.gmra.mrb[0].mxu0 %v1190
        %v1229 = vpop.f32.mrb[0].mxu0
        %v1230 = vadd.f32 0.0, %v1229
        %v1231 = vpop.f32.mrb[0].mxu0
        %v1232 = vpop.f32.mrb[0].mxu0
        %v1233 = vpop.f32.mrb[0].mxu0
        %1234 = vdwg.mxu0
        %1236 = vrot.lane.b32.xlu0 %v1006, 8
        %v1237 = vpop.permute.xlu0 %1236
        %1240 = vrot.lane.b32.xlu0 %v1118, 16
        %v1241 = vpop.permute.xlu0 %1240
        %1244 = vrot.lane.b32.xlu0 %v1230, 24
        %v1245 = vpop.permute.xlu0 %1244
        %v1247 = vsel %vm785, %v887, %v1237
        %vm1248 = vcmask 130048
        %v1249 = vsel %vm1248, %v1247, %v1241
        %vm1250 = vcmask 195584
        %v1251 = vsel %vm1250, %v1249, %v1245
        %s1252 = smul.u32 %s43, 8
        %s1253 = scalar_lea.vmem [#allocation4], %s1252
        %1254 = vst.msk [vmem:[%s1253] sm:$0xff] %vm734, %v1251
        %p1255 = scmp.eq.s32.totalorder %s43, 0
        // Predicated region
        $region93: #{tpu_custom_call.1} parent=63 // pred_check
          %p1256 = pneg %p1255
        $region94: #{tpu_custom_call.1} parent=63 // pred_check_branch
          %1258 = sbr.rel (%p1256) target = $region96
        $region95: #{tpu_custom_call.1} parent=63 // pred_region
          %v1259 = vld [vmem:[#allocation4] sm:$0xff]
          %v1260 = vpack.c.bf16 %v1259, %v1259
          %v1261 = vld [vmem:[%s9] sm:$0xf]
          %v1262 = vld [vmem:[%s9 + $0x4] sm:$0xf]
          %v1263 = vld [vmem:[%s9 + $0x8] sm:$0xf]
          %v1264 = vld [vmem:[%s9 + $0xc] sm:$0xf]
          %v1265 = vld [vmem:[%s10] sm:$0x1]
          %v1267 = vlaneseq
          %v1268 = vshrl.u32 %v1267, 7
          %v1269 = vsub.s32 0, %v1268
          %v1270 = vrot.slane %v1265, %v1269
          %v1276 = vunpack.c.l.b16 %v1261
          %v1277 = vunpack.c.l.b16 %v1262
          %v1278 = vunpack.c.l.b16 %v1263
          %v1279 = vunpack.c.l.b16 %v1264
          %v1280 = vpack.c.b16 %v1277, %v1276
          %v1281 = vpack.c.b16 %v1279, %v1278
          %v1285 = vsel %vm734, %v1260, 0
          %1287 = vmatprep.subr.bf16.mxu0 0
          %1288 = vmatpush1.bf16.msra.mxu0 %v1280
          %1289 = vmatprep.subr.bf16.mxu0 0
          %1290 = vmatpush1.bf16.msra.mxu0 %v1281
          %1291 = vmatprep.subr.bf16.mxu0 0
          %1292 = vmatpush1.bf16.msra.mxu0 0
          %1293 = vmatprep.subr.bf16.mxu0 0
          %1294 = vmatpush1.bf16.msra.mxu0 0
          %1295 = vmatprep.subr.bf16.mxu0 0
          %1296 = vmatpush1.bf16.msra.mxu0 0
          %1297 = vmatprep.subr.bf16.mxu0 0
          %1298 = vmatpush1.bf16.msra.mxu0 0
          %1299 = vmatprep.subr.bf16.mxu0 0
          %1300 = vmatpush1.bf16.msra.mxu0 0
          %1301 = vmatprep.subr.bf16.mxu0 0
          %1302 = vmatpush1.bf16.msra.mxu0 0
          %1303 = vmatprep.subr.bf16.mxu0 0
          %1304 = vmatpush1.bf16.msra.mxu0 0
          %1305 = vmatprep.subr.bf16.mxu0 0
          %1306 = vmatpush1.bf16.msra.mxu0 0
          %1307 = vmatprep.subr.bf16.mxu0 0
          %1308 = vmatpush1.bf16.msra.mxu0 0
          %1309 = vmatprep.subr.bf16.mxu0 0
          %1310 = vmatpush1.bf16.msra.mxu0 0
          %1311 = vmatprep.subr.bf16.mxu0 0
          %1312 = vmatpush1.bf16.msra.mxu0 0
          %1313 = vmatprep.subr.bf16.mxu0 0
          %1314 = vmatpush1.bf16.msra.mxu0 0
          %1315 = vmatprep.subr.bf16.mxu0 0
          %1316 = vmatpush1.bf16.msra.mxu0 0
          %1317 = vmatprep.subr.bf16.mxu0 0
          %1318 = vmatpush1.bf16.msra.mxu0 0
          %1319 = vmatprep.mubr.bf16.mxu0 0
          %1320 = vmatmul.mubr.bf16.gmra.mrb[0].mxu0 %v1285
          %v1321 = vpop.f32.mrb[0].mxu0
          %v1322 = vadd.f32 %v1270, %v1321
          %v1323 = vpop.f32.mrb[0].mxu0
          %v1324 = vpop.f32.mrb[0].mxu0
          %v1325 = vpop.f32.mrb[0].mxu0
          %1326 = vdwg.mxu0
          %1327 = vst.msk [vmem:[%s541] sm:$0xff] %vm734, %v1322
        $region96: #{tpu_custom_call.1} parent=63 // pred_fallthru
          _
        %s1328 = sand.u32 %s313, 1
        %s1329 = scalar_lea.sflag [#allocation7], %s1328
        %s1330 = sand.u32 %s313, 1
        %s1331 = smul.addr %s1330, 8
        %s1332 = scalar_lea.vmem [#allocation16], %s1331
        %s1333 = sand.u32 %s343, 1
        %s1334 = scalar_lea.sflag [#allocation18], %s1333
        %s1335 = sand.u32 %s343, 1
        %s1336 = smul.addr %s1335, 32
        %s1337 = scalar_lea.vmem [#allocation17], %s1336
        // Predicated region
        $region97: #{tpu_custom_call.1} parent=63 // pred_check
          %p1338 = pneg %p323
        $region98: #{tpu_custom_call.1} parent=63 // pred_check_branch
          %1340 = sbr.rel (%p1338) target = $region100
        $region99: #{tpu_custom_call.1} parent=63 // pred_region
          %s1342 = ssub.s32 128, 128
          %1343 = vsyncadd %s1329, %s1342
          %s1344 = sadd.s32 %s42, %s41
          %s1345 = smul.addr %s1344, 128
          %s1346 = scalar_lea.hbm %s11, %s1345
          %s1348 = sshll.u32 %s1332, 4
          %s1349 = int_to_ptr.vmem [resolvable:$true] %s1348
          %1351 = dma.vmem_to_hbm [thread:$0]  %s1349, 128, %s1346, %s1329
        $region100: #{tpu_custom_call.1} parent=63 // pred_fallthru
          _
        // Predicated region
        $region101: #{tpu_custom_call.1} parent=63 // pred_check
          %p1352 = pneg %p353
        $region102: #{tpu_custom_call.1} parent=63 // pred_check_branch
          %1354 = sbr.rel (%p1352) target = $region104
        $region103: #{tpu_custom_call.1} parent=63 // pred_region
          %s1355 = smul.u32 4, %s43
          %s1357 = ssub.s32 512, 512
          %1358 = vsyncadd %s1334, %s1357
          %s1359 = sadd.s32 %s42, %s1355
          %s1360 = smul.addr %s41, 4
          %s1361 = sadd.s32 %s1359, %s1360
          %s1362 = smul.addr %s1361, 128
          %s1363 = scalar_lea.hbm %s12, %s1362
          %s1364 = sshll.u32 %s1337, 4
          %s1365 = int_to_ptr.vmem [resolvable:$true] %s1364
          %1370 = dma.vmem_to_hbm [thread:$0]  %s1365, 512, %s1363, %s1334, 128, 128, 8
        $region104: #{tpu_custom_call.1} parent=63 // pred_fallthru
          _
      $region64: #{tpu_custom_call.1} parent=5 // pred_fallthru
        _
      %p1371 = scmp.le.s32.totalorder 2, %s31
      // Predicated region
      $region105: #{tpu_custom_call.1} parent=5 // pred_check
        %p1372 = pneg %p1371
      $region106: #{tpu_custom_call.1} parent=5 // pred_check_branch
        %1374 = sbr.rel (%p1372) target = $region108
      $region107: #{tpu_custom_call.1} parent=5 // pred_region
        %s1375 = ssub.s32 %s31, 2
        // Predicated region
        $region109: #{tpu_custom_call.1} parent=107 // pred_check
          %p1376 = pneg %p329
        $region110: #{tpu_custom_call.1} parent=107 // pred_check_branch
          %1378 = sbr.rel (%p1376) target = $region112
        $region111: #{tpu_custom_call.1} parent=107 // pred_region
          %s1379 = sand.u32 %s314, 1
          %s1380 = scalar_lea.sflag [#allocation7], %s1379
          %s1381 = sand.u32 %s314, 1
          %s1382 = smul.addr %s1381, 8
          %s1383 = scalar_lea.vmem [#allocation16], %s1382
          %1384 = dma.done %s1380, 128
        $region112: #{tpu_custom_call.1} parent=107 // pred_fallthru
          _
        // Predicated region
        $region113: #{tpu_custom_call.1} parent=107 // pred_check
          %p1385 = pneg %p359
        $region114: #{tpu_custom_call.1} parent=107 // pred_check_branch
          %1387 = sbr.rel (%p1385) target = $region116
        $region115: #{tpu_custom_call.1} parent=107 // pred_region
          %s1388 = sand.u32 %s344, 1
          %s1389 = scalar_lea.sflag [#allocation18], %s1388
          %s1390 = sand.u32 %s344, 1
          %s1391 = smul.addr %s1390, 32
          %s1392 = scalar_lea.vmem [#allocation17], %s1391
          %1393 = dma.done %s1389, 512
        $region116: #{tpu_custom_call.1} parent=107 // pred_fallthru
          _
      $region108: #{tpu_custom_call.1} parent=5 // pred_fallthru
        _
    $region6: #{tpu_custom_call.1} parent=1 // loop_footer
      %s35 = sadd.s32 1, %s31
    $region7: #{tpu_custom_call.1} parent=1 // loop_footer_branch
      %30 = sbr.rel target = $region3
    $region8: #{tpu_custom_call.1} parent=1 // loop_exit
      _
    %1394 = vsyncpa [#allocation6], 1
    %s1395 = scalar_lea.sflag [#allocation6], 1
    %1396 = vsyncpa %s1395, 1
    %1397 = vsyncpa [#allocation9], 1
    %1398 = vsyncpa [#allocation12], 1
    %1399 = vsyncpa [#allocation15], 1
    %1400 = vsyncpa [#allocation7], 1
    %s1401 = scalar_lea.sflag [#allocation7], 1
    %1402 = vsyncpa %s1401, 1
    %1403 = vsyncpa [#allocation18], 1
    %s1404 = scalar_lea.sflag [#allocation18], 1
    %1405 = vsyncpa %s1404, 1

</llo_original>
